<compile_context>
chip_gen: v6e
topology: v6e:2x2x1
jax: 0.10.0
libtpu: 0.0.40
codegen_flags: <defaults>
</compile_context>

<pallas_src>
import functools

import jax
import jax.numpy as jnp
from jax.experimental import pallas as pl
from jax.experimental.pallas import tpu as pltpu

BN_EPS = 1e-5

# Per-generation policy (perf review):
#   v5e/v6e: 128 MiB VMEM -> larger N tiles + higher scoped-VMEM cap.
#   v7x:     64 MiB VMEM, 2 TCs -> moderate tiles, single-buffer resident weight,
#            split batch grid per core.
_BLOCK_N_CAP = {5: 1024, 6: 1024, 7: 512}
_VMEM_LIMIT = {5: 96 * 2**20, 6: 96 * 2**20, 7: 40 * 2**20}
_DEFAULT_CAP = 512
_DEFAULT_VMEM = 48 * 2**20


def _tpu_generation():
    try:
        kind = jax.devices()[0].device_kind.lower()
    except Exception:
        return None
    if "v7" in kind or "tpu7" in kind:
        return 7
    if "v6" in kind:
        return 6
    if "v5" in kind:
        return 5
    return None


def _round_up(x, m):
    return -(-x // m) * m


def _pick_block_n(n, cap):
    # Multiple of 128: MXU M-dim stays full, stores unmasked.  Awkward N is
    # handled by padding + masking, never by tiny divisors or full-array blocks.
    return max(128, min(cap, _round_up(n, 128)))


def _resident_spec(shape, index_map, single_buffer):
    # The weight block never changes across grid steps; on VMEM-tight parts
    # (v7x) request single buffering so it isn't double-buffered.
    if single_buffer and hasattr(pl, "Buffered"):
        try:
            return pl.BlockSpec(shape, index_map, pipeline_mode=pl.Buffered(1))
        except Exception:
            pass
    return pl.BlockSpec(shape, index_map)


# ---------------------------------------------------------------------------
# Kernel 1: h = x @ W1 (bf16 out) + per-core sum(h), sum(h*h) across N tiles.
# ---------------------------------------------------------------------------
def _linear_stats_kernel(x_ref, w_ref, h_ref, s_ref, ss_ref):
    @pl.when(pl.program_id(1) == 0)
    def _():
        s_ref[...] = jnp.zeros_like(s_ref)
        ss_ref[...] = jnp.zeros_like(ss_ref)

    h = jnp.dot(x_ref[...], w_ref[...], preferred_element_type=jnp.float32)
    # bf16 store: h is the dominant HBM stream (kernel-1 write + kernel-2 read).
    # BN1 stats are taken from the f32 accumulator before the downcast.
    h_ref[...] = h.astype(jnp.bfloat16)
    s_ref[...] += jnp.sum(h, axis=0, keepdims=True)
    ss_ref[...] += jnp.sum(h * h, axis=0, keepdims=True)


def _linear_stats(x16, w16, block_n, num_cores, tiles_per_core,
                  vmem_limit, single_buffer_w):
    n_pad, f_in = x16.shape
    f_out = w16.shape[1]
    row_map = lambda c, t: (c * tiles_per_core + t, 0)
    stat_map = lambda c, t: (c, 0)
    cost = pl.CostEstimate(
        flops=2 * n_pad * f_in * f_out + 3 * n_pad * f_out,
        transcendentals=0,
        bytes_accessed=2 * n_pad * f_in + 2 * f_in * f_out
        + 2 * n_pad * f_out + 8 * num_cores * f_out,
    )
    return pl.pallas_call(
        _linear_stats_kernel,
        grid=(num_cores, tiles_per_core),
        in_specs=[
            pl.BlockSpec((block_n, f_in), row_map),                         # streamed x
            _resident_spec((f_in, f_out), lambda c, t: (0, 0), single_buffer_w),
        ],
        out_specs=(
            pl.BlockSpec((block_n, f_out), row_map),                        # streamed bf16 h
            pl.BlockSpec((1, f_out), stat_map),                             # per-core sum
            pl.BlockSpec((1, f_out), stat_map),                             # per-core sumsq
        ),
        out_shape=(
            jax.ShapeDtypeStruct((n_pad, f_out), jnp.bfloat16),
            jax.ShapeDtypeStruct((num_cores, f_out), jnp.float32),
            jax.ShapeDtypeStruct((num_cores, f_out), jnp.float32),
        ),
        compiler_params=pltpu.CompilerParams(
            dimension_semantics=("parallel", "arbitrary"),
            vmem_limit_bytes=vmem_limit,
        ),
        cost_estimate=cost,
    )(x16, w16)


# ---------------------------------------------------------------------------
# Kernel 2: a = relu(h*scale1 + shift1); z = a @ W2  + per-core z stats.
# Rows past the true batch (padding) are masked out of a so they contribute 0.
# ---------------------------------------------------------------------------
def _bn_relu_linear_stats_kernel(h_ref, sc_ref, sh_ref, w_ref,
                                 z_ref, s_ref, ss_ref,
                                 *, block_n, tiles_per_core, n_valid, masked):
    @pl.when(pl.program_id(1) == 0)
    def _():
        s_ref[...] = jnp.zeros_like(s_ref)
        ss_ref[...] = jnp.zeros_like(ss_ref)

    h = h_ref[...].astype(jnp.float32)
    a = jnp.maximum(h * sc_ref[...] + sh_ref[...], 0.0)
    if masked:
        row0 = (pl.program_id(0) * tiles_per_core + pl.program_id(1)) * block_n
        rows = row0 + jax.lax.broadcasted_iota(jnp.int32, (block_n, 1), 0)
        a = jnp.where(rows < n_valid, a, 0.0)
    z = jnp.dot(a.astype(jnp.bfloat16), w_ref[...],
                preferred_element_type=jnp.float32)
    z_ref[...] = z
    s_ref[...] += jnp.sum(z, axis=0, keepdims=True)
    ss_ref[...] += jnp.sum(z * z, axis=0, keepdims=True)


def _bn_relu_linear_stats(h16, scale1, shift1, w16, block_n, num_cores,
                          tiles_per_core, n_valid, masked, vmem_limit,
                          single_buffer_w):
    n_pad, f_in = h16.shape
    f_out = w16.shape[1]
    row_map = lambda c, t: (c * tiles_per_core + t, 0)
    stat_map = lambda c, t: (c, 0)
    kernel = functools.partial(
        _bn_relu_linear_stats_kernel,
        block_n=block_n, tiles_per_core=tiles_per_core,
        n_valid=n_valid, masked=masked)
    cost = pl.CostEstimate(
        flops=2 * n_pad * f_in * f_out + 4 * n_pad * f_in + 3 * n_pad * f_out,
        transcendentals=0,
        bytes_accessed=2 * n_pad * f_in + 2 * f_in * f_out + 4 * n_pad * f_out
        + 16 * f_in + 8 * num_cores * f_out,
    )
    return pl.pallas_call(
        kernel,
        grid=(num_cores, tiles_per_core),
        in_specs=[
            pl.BlockSpec((block_n, f_in), row_map),          # streamed bf16 h
            pl.BlockSpec((1, f_in), lambda c, t: (0, 0)),    # resident scale1
            pl.BlockSpec((1, f_in), lambda c, t: (0, 0)),    # resident shift1
            _resident_spec((f_in, f_out), lambda c, t: (0, 0), single_buffer_w),
        ],
        out_specs=(
            pl.BlockSpec((block_n, f_out), row_map),         # streamed z tile (f32)
            pl.BlockSpec((1, f_out), stat_map),
            pl.BlockSpec((1, f_out), stat_map),
        ),
        out_shape=(
            jax.ShapeDtypeStruct((n_pad, f_out), jnp.float32),
            jax.ShapeDtypeStruct((num_cores, f_out), jnp.float32),
            jax.ShapeDtypeStruct((num_cores, f_out), jnp.float32),
        ),
        compiler_params=pltpu.CompilerParams(
            dimension_semantics=("parallel", "arbitrary"),
            vmem_limit_bytes=vmem_limit,
        ),
        cost_estimate=cost,
    )(h16, scale1, shift1, w16)


# ---------------------------------------------------------------------------
# Kernel 3: out = z*scale2 + shift2  (elementwise, fully parallel over N).
# ---------------------------------------------------------------------------
def _scale_shift_kernel(z_ref, sc_ref, sh_ref, o_ref):
    o_ref[...] = z_ref[...] * sc_ref[...] + sh_ref[...]


def _scale_shift(z, scale, shift, block_n, vmem_limit):
    n_pad, f = z.shape
    cost = pl.CostEstimate(flops=2 * n_pad * f, transcendentals=0,
                           bytes_accessed=8 * n_pad * f + 8 * f)
    return pl.pallas_call(
        _scale_shift_kernel,
        grid=(n_pad // block_n,),
        in_specs=[
            pl.BlockSpec((block_n, f), lambda i: (i, 0)),
            pl.BlockSpec((1, f), lambda i: (0, 0)),
            pl.BlockSpec((1, f), lambda i: (0, 0)),
        ],
        out_specs=pl.BlockSpec((block_n, f), lambda i: (i, 0)),
        out_shape=jax.ShapeDtypeStruct((n_pad, f), jnp.float32),
        compiler_params=pltpu.CompilerParams(
            dimension_semantics=("parallel",),
            vmem_limit_bytes=vmem_limit,
        ),
        cost_estimate=cost,
    )(z, scale, shift)
    # TODO(synk): kernel 3 could be folded into kernel 2 (z kept in VMEM scratch,
    # two-phase grid) when N*f_out fits VMEM; kept separate for generality.


# ---------------------------------------------------------------------------
# Tiny (num_cores, F) glue: combine per-core partials, fold training-mode BN.
# ---------------------------------------------------------------------------
def _fold_bn(s, ss, n, gamma, beta):
    s = jnp.sum(s, axis=0, keepdims=True)        # combine per-core partial rows
    ss = jnp.sum(ss, axis=0, keepdims=True)
    inv_n = jnp.float32(1.0 / n)
    mean = s * inv_n
    var = ss * inv_n - mean * mean               # biased variance (BN training mode)
    scale = gamma * jax.lax.rsqrt(var + BN_EPS)
    shift = beta - mean * scale
    return scale, shift


def projection_head(x, w1, g1, b1, w2, g2, b2, *, block_n=None, num_cores=None):
    """x: (N, in_features) f32. Weights stored (F_in, F_out). Returns (N, out) f32."""
    n = x.shape[0]
    gen = _tpu_generation()
    if num_cores is None:
        num_cores = 2 if gen == 7 else 1          # v7x: 2 TensorCores / chip
    cap = _BLOCK_N_CAP.get(gen, _DEFAULT_CAP)
    vmem_limit = _VMEM_LIMIT.get(gen, _DEFAULT_VMEM)
    single_buffer_w = gen == 7                    # 64 MiB VMEM: don't double-buffer W

    bn_ = _pick_block_n(n, cap) if block_n is None else max(8, _round_up(block_n, 8))
    n_tiles = _round_up(max(1, -(-n // bn_)), num_cores)
    tiles_per_core = n_tiles // num_cores
    n_pad = n_tiles * bn_
    masked = n_pad != n

    # bf16 matmul operands; BN statistics / normalization math stay in f32.
    x16 = x.astype(jnp.bfloat16)
    if masked:
        # Zero pad rows: exact zeros through W1, masked out before W2.
        x16 = jnp.pad(x16, ((0, n_pad - n), (0, 0)))
    w1_16 = w1.astype(jnp.bfloat16)
    w2_16 = w2.astype(jnp.bfloat16)
    g1 = jnp.asarray(g1, jnp.float32).reshape(1, -1)
    b1 = jnp.asarray(b1, jnp.float32).reshape(1, -1)
    g2 = jnp.asarray(g2, jnp.float32).reshape(1, -1)
    b2 = jnp.asarray(b2, jnp.float32).reshape(1, -1)

    h16, s1, ss1 = _linear_stats(x16, w1_16, bn_, num_cores, tiles_per_core,
                                 vmem_limit, single_buffer_w)
    sc1, sh1 = _fold_bn(s1, ss1, n, g1, b1)
    z, s2, ss2 = _bn_relu_linear_stats(h16, sc1, sh1, w2_16, bn_, num_cores,
                                       tiles_per_core, n, masked,
                                       vmem_limit, single_buffer_w)
    sc2, sh2 = _fold_bn(s2, ss2, n, g2, b2)
    out = _scale_shift(z, sc2, sh2, bn_, vmem_limit)
    # TODO(synk): BatchNorm1d running_mean/running_var buffer updates (training
    # side effect) are not emitted; only the forward output is produced.
    return out[:n] if masked else out


def projection_head_ref(x, w1, g1, b1, w2, g2, b2):
    """Pure-JAX reference mirroring the kernel numerics (bf16 matmul operands,
    bf16-stored h, f32 stats, training-mode BN via sum / sum-of-squares)."""
    w1_16 = w1.astype(jnp.bfloat16)
    w2_16 = w2.astype(jnp.bfloat16)
    h = jnp.dot(x.astype(jnp.bfloat16), w1_16, preferred_element_type=jnp.float32)
    m1 = h.mean(axis=0, keepdims=True)
    v1 = (h * h).mean(axis=0, keepdims=True) - m1 * m1
    sc1 = g1 * jax.lax.rsqrt(v1 + BN_EPS)
    sh1 = b1 - m1 * sc1
    h16 = h.astype(jnp.bfloat16).astype(jnp.float32)     # mirrors bf16 h round-trip
    a = jnp.maximum(h16 * sc1 + sh1, 0.0)
    z = jnp.dot(a.astype(jnp.bfloat16), w2_16, preferred_element_type=jnp.float32)
    m2 = z.mean(axis=0, keepdims=True)
    v2 = (z * z).mean(axis=0, keepdims=True) - m2 * m2
    sc2 = g2 * jax.lax.rsqrt(v2 + BN_EPS)
    sh2 = b2 - m2 * sc2
    return z * sc2 + sh2


if __name__ == "__main__":
    # Lane-dense feature dims (multiples of 128); batch spans several N tiles
    # so the accumulate-then-normalize path is exercised.
    N, IN, HID, OUT = 512, 128, 256, 128
    BLOCK_N = 128   # 4 N tiles

    key = jax.random.PRNGKey(0)
    kx, kw1, kw2, kg1, kg2 = jax.random.split(key, 5)
    x = jax.random.normal(kx, (N, IN), dtype=jnp.float32)
    w1 = jax.random.normal(kw1, (IN, HID), dtype=jnp.float32) * (1.0 / jnp.sqrt(IN))
    w2 = jax.random.normal(kw2, (HID, OUT), dtype=jnp.float32) * (1.0 / jnp.sqrt(HID))
    g1 = 1.0 + 0.1 * jax.random.normal(kg1, (1, HID), dtype=jnp.float32)
    b1 = jnp.zeros((1, HID), dtype=jnp.float32)
    g2 = 1.0 + 0.1 * jax.random.normal(kg2, (1, OUT), dtype=jnp.float32)
    b2 = jnp.zeros((1, OUT), dtype=jnp.float32)

    fwd = jax.jit(functools.partial(projection_head, block_n=BLOCK_N))
    out = jax.block_until_ready(fwd(x, w1, g1, b1, w2, g2, b2))
    ref = projection_head_ref(x, w1, g1, b1, w2, g2, b2)
    assert out.shape == (N, OUT)
    assert jnp.allclose(out, ref, atol=2e-3, rtol=2e-3), "mismatch vs reference"

    # Ragged batch: exercises pad-to-tile + in-kernel row masking of BN stats.
    N2 = 200
    x2 = jax.random.normal(jax.random.PRNGKey(1), (N2, IN), dtype=jnp.float32)
    out2 = jax.block_until_ready(jax.jit(projection_head)(x2, w1, g1, b1, w2, g2, b2))
    ref2 = projection_head_ref(x2, w1, g1, b1, w2, g2, b2)
    assert out2.shape == (N2, OUT)
    assert jnp.allclose(out2, ref2, atol=2e-3, rtol=2e-3), "mismatch (ragged batch)"

    print("KERNEL_OK")
</pallas_src>

<mosaic_0001>
module attributes {stable_mosaic.version = 11 : i64} {
  func.func @_linear_stats_kernel(%arg0: i32, %arg1: i32, %arg2: memref<128x128xbf16, #tpu.memory_space<vmem>>, %arg3: memref<128x256xbf16, #tpu.memory_space<vmem>>, %arg4: memref<128x256xbf16, #tpu.memory_space<vmem>>, %arg5: memref<1x256xf32, #tpu.memory_space<vmem>>, %arg6: memref<1x256xf32, #tpu.memory_space<vmem>>) attributes {dimension_semantics = [#tpu.dimension_semantics<parallel>, #tpu.dimension_semantics<arbitrary>], iteration_bounds = array<i64: 1, 4>, scalar_prefetch = 0 : i64, scratch_operands = 0 : i64, tpu.core_type = #tpu.core_type<tc>, window_params = [{transform_indices = @transform_0, window_bounds = array<i64: 128, 128>}, {pipeline_mode = #tpu.pipeline_mode<synchronous>, transform_indices = @transform_1, window_bounds = array<i64: 128, 256>}, {transform_indices = @transform_2, window_bounds = array<i64: 128, 256>}, {transform_indices = @transform_3, window_bounds = array<i64: 1, 256>}, {transform_indices = @transform_4, window_bounds = array<i64: 1, 256>}]} {
    %c0_i32 = arith.constant 0 : i32
    %0 = arith.cmpi eq, %arg1, %c0_i32 : i32
    %1 = arith.extui %0 : i1 to i32
    %c0_i32_0 = arith.constant 0 : i32
    %2 = arith.cmpi ne, %1, %c0_i32_0 : i32
    scf.if %2 {
      %cst_16 = arith.constant 0.000000e+00 : f32
      %19 = vector.broadcast %cst_16 : f32 to vector<1x256xf32>
      %c0_17 = arith.constant 0 : index
      %c0_18 = arith.constant 0 : index
      %20 = vector.load %arg5[%c0_17, %c0_18] : memref<1x256xf32, #tpu.memory_space<vmem>>, vector<1x256xf32>
      tpu.vector_store %arg5[%c0_17, %c0_18], %19 {strides = array<i32>} : memref<1x256xf32, #tpu.memory_space<vmem>>, vector<1x256xf32>,
      %cst_19 = arith.constant 0.000000e+00 : f32
      %21 = vector.broadcast %cst_19 : f32 to vector<1x256xf32>
      %c0_20 = arith.constant 0 : index
      %c0_21 = arith.constant 0 : index
      %22 = vector.load %arg6[%c0_20, %c0_21] : memref<1x256xf32, #tpu.memory_space<vmem>>, vector<1x256xf32>
      tpu.vector_store %arg6[%c0_20, %c0_21], %21 {strides = array<i32>} : memref<1x256xf32, #tpu.memory_space<vmem>>, vector<1x256xf32>,
    } else {
    }
    %c0 = arith.constant 0 : index
    %c0_1 = arith.constant 0 : index
    %3 = vector.load %arg2[%c0, %c0_1] : memref<128x128xbf16, #tpu.memory_space<vmem>>, vector<128x128xbf16>
    %c0_2 = arith.constant 0 : index
    %c0_3 = arith.constant 0 : index
    %4 = vector.load %arg3[%c0_2, %c0_3] : memref<128x256xbf16, #tpu.memory_space<vmem>>, vector<128x256xbf16>
    %cst = arith.constant dense<0.000000e+00> : vector<128x256xf32>
    %5 = tpu.matmul %3, %4, %cst {dimension_numbers = #tpu.dot_dimension_numbers<[1], [0], [0], [1], [0, 0, 1, 1], [], []>} : vector<128x128xbf16>, vector<128x256xbf16>, vector<128x256xf32> -> vector<128x256xf32>
    %6 = arith.truncf %5 : vector<128x256xf32> to vector<128x256xbf16>
    %c0_4 = arith.constant 0 : index
    %c0_5 = arith.constant 0 : index
    %7 = vector.load %arg4[%c0_4, %c0_5] : memref<128x256xbf16, #tpu.memory_space<vmem>>, vector<128x256xbf16>
    tpu.vector_store %arg4[%c0_4, %c0_5], %6 {strides = array<i32>} : memref<128x256xbf16, #tpu.memory_space<vmem>>, vector<128x256xbf16>,
    %c0_6 = arith.constant 0 : index
    %c0_7 = arith.constant 0 : index
    %8 = vector.load %arg5[%c0_6, %c0_7] : memref<1x256xf32, #tpu.memory_space<vmem>>, vector<1x256xf32>
    %cst_8 = arith.constant dense<0.000000e+00> : vector<256xf32>
    %9 = vector.multi_reduction <add>, %5, %cst_8 [0] : vector<128x256xf32> to vector<256xf32>
    %10 = vector.shape_cast %9 : vector<256xf32> to vector<1x256xf32>
    %11 = arith.addf %8, %10 : vector<1x256xf32>
    %c0_9 = arith.constant 0 : index
    %c0_10 = arith.constant 0 : index
    %12 = vector.load %arg5[%c0_9, %c0_10] : memref<1x256xf32, #tpu.memory_space<vmem>>, vector<1x256xf32>
    tpu.vector_store %arg5[%c0_9, %c0_10], %11 {strides = array<i32>} : memref<1x256xf32, #tpu.memory_space<vmem>>, vector<1x256xf32>,
    %c0_11 = arith.constant 0 : index
    %c0_12 = arith.constant 0 : index
    %13 = vector.load %arg6[%c0_11, %c0_12] : memref<1x256xf32, #tpu.memory_space<vmem>>, vector<1x256xf32>
    %14 = arith.mulf %5, %5 : vector<128x256xf32>
    %cst_13 = arith.constant dense<0.000000e+00> : vector<256xf32>
    %15 = vector.multi_reduction <add>, %14, %cst_13 [0] : vector<128x256xf32> to vector<256xf32>
    %16 = vector.shape_cast %15 : vector<256xf32> to vector<1x256xf32>
    %17 = arith.addf %13, %16 : vector<1x256xf32>
    %c0_14 = arith.constant 0 : index
    %c0_15 = arith.constant 0 : index
    %18 = vector.load %arg6[%c0_14, %c0_15] : memref<1x256xf32, #tpu.memory_space<vmem>>, vector<1x256xf32>
    tpu.vector_store %arg6[%c0_14, %c0_15], %17 {strides = array<i32>} : memref<1x256xf32, #tpu.memory_space<vmem>>, vector<1x256xf32>,
    return
  }
  func.func @transform_0(%arg0: i32, %arg1: i32) -> (i32, i32) {
    %c4_i32 = arith.constant 4 : i32
    %0 = arith.muli %arg0, %c4_i32 : i32
    %1 = arith.addi %0, %arg1 : i32
    %c0_i32 = arith.constant 0 : i32
    %c0_i32_0 = arith.constant 0 : i32
    return %1, %c0_i32 : i32, i32
  }
  func.func @transform_1(%arg0: i32, %arg1: i32) -> (i32, i32) {
    %c0_i32 = arith.constant 0 : i32
    %c0_i32_0 = arith.constant 0 : i32
    %c0_i32_1 = arith.constant 0 : i32
    return %c0_i32, %c0_i32_0 : i32, i32
  }
  func.func @transform_2(%arg0: i32, %arg1: i32) -> (i32, i32) {
    %c4_i32 = arith.constant 4 : i32
    %0 = arith.muli %arg0, %c4_i32 : i32
    %1 = arith.addi %0, %arg1 : i32
    %c0_i32 = arith.constant 0 : i32
    %c0_i32_0 = arith.constant 0 : i32
    return %1, %c0_i32 : i32, i32
  }
  func.func @transform_3(%arg0: i32, %arg1: i32) -> (i32, i32) {
    %c0_i32 = arith.constant 0 : i32
    %c0_i32_0 = arith.constant 0 : i32
    return %arg0, %c0_i32 : i32, i32
  }
  func.func @transform_4(%arg0: i32, %arg1: i32) -> (i32, i32) {
    %c0_i32 = arith.constant 0 : i32
    %c0_i32_0 = arith.constant 0 : i32
    return %arg0, %c0_i32 : i32, i32
  }
}

module attributes {stable_mosaic.version = 11 : i64} {
  func.func @_bn_relu_linear_stats_kernel(%arg0: i32, %arg1: i32, %arg2: memref<128x256xbf16, #tpu.memory_space<vmem>>, %arg3: memref<1x256xf32, #tpu.memory_space<vmem>>, %arg4: memref<1x256xf32, #tpu.memory_space<vmem>>, %arg5: memref<256x128xbf16, #tpu.memory_space<vmem>>, %arg6: memref<128x128xf32, #tpu.memory_space<vmem>>, %arg7: memref<1x128xf32, #tpu.memory_space<vmem>>, %arg8: memref<1x128xf32, #tpu.memory_space<vmem>>) attributes {dimension_semantics = [#tpu.dimension_semantics<parallel>, #tpu.dimension_semantics<arbitrary>], iteration_bounds = array<i64: 1, 4>, scalar_prefetch = 0 : i64, scratch_operands = 0 : i64, tpu.core_type = #tpu.core_type<tc>, window_params = [{transform_indices = @transform_0, window_bounds = array<i64: 128, 256>}, {pipeline_mode = #tpu.pipeline_mode<synchronous>, transform_indices = @transform_1, window_bounds = array<i64: 1, 256>}, {pipeline_mode = #tpu.pipeline_mode<synchronous>, transform_indices = @transform_2, window_bounds = array<i64: 1, 256>}, {pipeline_mode = #tpu.pipeline_mode<synchronous>, transform_indices = @transform_3, window_bounds = array<i64: 256, 128>}, {transform_indices = @transform_4, window_bounds = array<i64: 128, 128>}, {transform_indices = @transform_5, window_bounds = array<i64: 1, 128>}, {transform_indices = @transform_6, window_bounds = array<i64: 1, 128>}]} {
    %c0_i32 = arith.constant 0 : i32
    %0 = arith.cmpi eq, %arg1, %c0_i32 : i32
    %1 = arith.extui %0 : i1 to i32
    %c0_i32_0 = arith.constant 0 : i32
    %2 = arith.cmpi ne, %1, %c0_i32_0 : i32
    scf.if %2 {
      %cst_21 = arith.constant 0.000000e+00 : f32
      %28 = vector.broadcast %cst_21 : f32 to vector<1x128xf32>
      %c0_22 = arith.constant 0 : index
      %c0_23 = arith.constant 0 : index
      %29 = vector.load %arg7[%c0_22, %c0_23] : memref<1x128xf32, #tpu.memory_space<vmem>>, vector<1x128xf32>
      tpu.vector_store %arg7[%c0_22, %c0_23], %28 {strides = array<i32>} : memref<1x128xf32, #tpu.memory_space<vmem>>, vector<1x128xf32>,
      %cst_24 = arith.constant 0.000000e+00 : f32
      %30 = vector.broadcast %cst_24 : f32 to vector<1x128xf32>
      %c0_25 = arith.constant 0 : index
      %c0_26 = arith.constant 0 : index
      %31 = vector.load %arg8[%c0_25, %c0_26] : memref<1x128xf32, #tpu.memory_space<vmem>>, vector<1x128xf32>
      tpu.vector_store %arg8[%c0_25, %c0_26], %30 {strides = array<i32>} : memref<1x128xf32, #tpu.memory_space<vmem>>, vector<1x128xf32>,
    } else {
    }
    %c0 = arith.constant 0 : index
    %c0_1 = arith.constant 0 : index
    %3 = vector.load %arg2[%c0, %c0_1] : memref<128x256xbf16, #tpu.memory_space<vmem>>, vector<128x256xbf16>
    %4 = arith.extf %3 : vector<128x256xbf16> to vector<128x256xf32>
    %c0_2 = arith.constant 0 : index
    %c0_3 = arith.constant 0 : index
    %5 = vector.load %arg3[%c0_2, %c0_3] : memref<1x256xf32, #tpu.memory_space<vmem>>, vector<1x256xf32>
    %6 = vector.broadcast %5 : vector<1x256xf32> to vector<128x256xf32>
    %7 = arith.mulf %4, %6 : vector<128x256xf32>
    %c0_4 = arith.constant 0 : index
    %c0_5 = arith.constant 0 : index
    %8 = vector.load %arg4[%c0_4, %c0_5] : memref<1x256xf32, #tpu.memory_space<vmem>>, vector<1x256xf32>
    %9 = vector.broadcast %8 : vector<1x256xf32> to vector<128x256xf32>
    %10 = arith.addf %7, %9 : vector<128x256xf32>
    %cst = arith.constant 0.000000e+00 : f32
    %11 = vector.broadcast %cst : f32 to vector<128x256xf32>
    %12 = arith.maximumf %10, %11 : vector<128x256xf32>
    %13 = arith.truncf %12 : vector<128x256xf32> to vector<128x256xbf16>
    %c0_6 = arith.constant 0 : index
    %c0_7 = arith.constant 0 : index
    %14 = vector.load %arg5[%c0_6, %c0_7] : memref<256x128xbf16, #tpu.memory_space<vmem>>, vector<256x128xbf16>
    %cst_8 = arith.constant dense<0.000000e+00> : vector<128x128xf32>
    %15 = tpu.matmul %13, %14, %cst_8 {dimension_numbers = #tpu.dot_dimension_numbers<[1], [0], [0], [1], [0, 0, 1, 1], [], []>} : vector<128x256xbf16>, vector<256x128xbf16>, vector<128x128xf32> -> vector<128x128xf32>
    %c0_9 = arith.constant 0 : index
    %c0_10 = arith.constant 0 : index
    %16 = vector.load %arg6[%c0_9, %c0_10] : memref<128x128xf32, #tpu.memory_space<vmem>>, vector<128x128xf32>
    tpu.vector_store %arg6[%c0_9, %c0_10], %15 {strides = array<i32>} : memref<128x128xf32, #tpu.memory_space<vmem>>, vector<128x128xf32>,
    %c0_11 = arith.constant 0 : index
    %c0_12 = arith.constant 0 : index
    %17 = vector.load %arg7[%c0_11, %c0_12] : memref<1x128xf32, #tpu.memory_space<vmem>>, vector<1x128xf32>
    %cst_13 = arith.constant dense<0.000000e+00> : vector<128xf32>
    %18 = vector.multi_reduction <add>, %15, %cst_13 [0] : vector<128x128xf32> to vector<128xf32>
    %19 = vector.shape_cast %18 : vector<128xf32> to vector<1x128xf32>
    %20 = arith.addf %17, %19 : vector<1x128xf32>
    %c0_14 = arith.constant 0 : index
    %c0_15 = arith.constant 0 : index
    %21 = vector.load %arg7[%c0_14, %c0_15] : memref<1x128xf32, #tpu.memory_space<vmem>>, vector<1x128xf32>
    tpu.vector_store %arg7[%c0_14, %c0_15], %20 {strides = array<i32>} : memref<1x128xf32, #tpu.memory_space<vmem>>, vector<1x128xf32>,
    %c0_16 = arith.constant 0 : index
    %c0_17 = arith.constant 0 : index
    %22 = vector.load %arg8[%c0_16, %c0_17] : memref<1x128xf32, #tpu.memory_space<vmem>>, vector<1x128xf32>
    %23 = arith.mulf %15, %15 : vector<128x128xf32>
    %cst_18 = arith.constant dense<0.000000e+00> : vector<128xf32>
    %24 = vector.multi_reduction <add>, %23, %cst_18 [0] : vector<128x128xf32> to vector<128xf32>
    %25 = vector.shape_cast %24 : vector<128xf32> to vector<1x128xf32>
    %26 = arith.addf %22, %25 : vector<1x128xf32>
    %c0_19 = arith.constant 0 : index
    %c0_20 = arith.constant 0 : index
    %27 = vector.load %arg8[%c0_19, %c0_20] : memref<1x128xf32, #tpu.memory_space<vmem>>, vector<1x128xf32>
    tpu.vector_store %arg8[%c0_19, %c0_20], %26 {strides = array<i32>} : memref<1x128xf32, #tpu.memory_space<vmem>>, vector<1x128xf32>,
    return
  }
  func.func @transform_0(%arg0: i32, %arg1: i32) -> (i32, i32) {
    %c4_i32 = arith.constant 4 : i32
    %0 = arith.muli %arg0, %c4_i32 : i32
    %1 = arith.addi %0, %arg1 : i32
    %c0_i32 = arith.constant 0 : i32
    %c0_i32_0 = arith.constant 0 : i32
    return %1, %c0_i32 : i32, i32
  }
  func.func @transform_1(%arg0: i32, %arg1: i32) -> (i32, i32) {
    %c0_i32 = arith.constant 0 : i32
    %c0_i32_0 = arith.constant 0 : i32
    %c0_i32_1 = arith.constant 0 : i32
    return %c0_i32, %c0_i32_0 : i32, i32
  }
  func.func @transform_2(%arg0: i32, %arg1: i32) -> (i32, i32) {
    %c0_i32 = arith.constant 0 : i32
    %c0_i32_0 = arith.constant 0 : i32
    %c0_i32_1 = arith.constant 0 : i32
    return %c0_i32, %c0_i32_0 : i32, i32
  }
  func.func @transform_3(%arg0: i32, %arg1: i32) -> (i32, i32) {
    %c0_i32 = arith.constant 0 : i32
    %c0_i32_0 = arith.constant 0 : i32
    %c0_i32_1 = arith.constant 0 : i32
    return %c0_i32, %c0_i32_0 : i32, i32
  }
  func.func @transform_4(%arg0: i32, %arg1: i32) -> (i32, i32) {
    %c4_i32 = arith.constant 4 : i32
    %0 = arith.muli %arg0, %c4_i32 : i32
    %1 = arith.addi %0, %arg1 : i32
    %c0_i32 = arith.constant 0 : i32
    %c0_i32_0 = arith.constant 0 : i32
    return %1, %c0_i32 : i32, i32
  }
  func.func @transform_5(%arg0: i32, %arg1: i32) -> (i32, i32) {
    %c0_i32 = arith.constant 0 : i32
    %c0_i32_0 = arith.constant 0 : i32
    return %arg0, %c0_i32 : i32, i32
  }
  func.func @transform_6(%arg0: i32, %arg1: i32) -> (i32, i32) {
    %c0_i32 = arith.constant 0 : i32
    %c0_i32_0 = arith.constant 0 : i32
    return %arg0, %c0_i32 : i32, i32
  }
}

module attributes {stable_mosaic.version = 11 : i64} {
  func.func @_scale_shift_kernel(%arg0: i32, %arg1: memref<128x128xf32, #tpu.memory_space<vmem>>, %arg2: memref<1x128xf32, #tpu.memory_space<vmem>>, %arg3: memref<1x128xf32, #tpu.memory_space<vmem>>, %arg4: memref<128x128xf32, #tpu.memory_space<vmem>>) attributes {dimension_semantics = [#tpu.dimension_semantics<parallel>], iteration_bounds = array<i64: 4>, scalar_prefetch = 0 : i64, scratch_operands = 0 : i64, tpu.core_type = #tpu.core_type<tc>, window_params = [{transform_indices = @transform_0, window_bounds = array<i64: 128, 128>}, {pipeline_mode = #tpu.pipeline_mode<synchronous>, transform_indices = @transform_1, window_bounds = array<i64: 1, 128>}, {pipeline_mode = #tpu.pipeline_mode<synchronous>, transform_indices = @transform_2, window_bounds = array<i64: 1, 128>}, {transform_indices = @transform_3, window_bounds = array<i64: 128, 128>}]} {
    %c0 = arith.constant 0 : index
    %c0_0 = arith.constant 0 : index
    %0 = vector.load %arg1[%c0, %c0_0] : memref<128x128xf32, #tpu.memory_space<vmem>>, vector<128x128xf32>
    %c0_1 = arith.constant 0 : index
    %c0_2 = arith.constant 0 : index
    %1 = vector.load %arg2[%c0_1, %c0_2] : memref<1x128xf32, #tpu.memory_space<vmem>>, vector<1x128xf32>
    %2 = vector.broadcast %1 : vector<1x128xf32> to vector<128x128xf32>
    %3 = arith.mulf %0, %2 : vector<128x128xf32>
    %c0_3 = arith.constant 0 : index
    %c0_4 = arith.constant 0 : index
    %4 = vector.load %arg3[%c0_3, %c0_4] : memref<1x128xf32, #tpu.memory_space<vmem>>, vector<1x128xf32>
    %5 = vector.broadcast %4 : vector<1x128xf32> to vector<128x128xf32>
    %6 = arith.addf %3, %5 : vector<128x128xf32>
    %c0_5 = arith.constant 0 : index
    %c0_6 = arith.constant 0 : index
    %7 = vector.load %arg4[%c0_5, %c0_6] : memref<128x128xf32, #tpu.memory_space<vmem>>, vector<128x128xf32>
    tpu.vector_store %arg4[%c0_5, %c0_6], %6 {strides = array<i32>} : memref<128x128xf32, #tpu.memory_space<vmem>>, vector<128x128xf32>,
    return
  }
  func.func @transform_0(%arg0: i32) -> (i32, i32) {
    %c0_i32 = arith.constant 0 : i32
    %c0_i32_0 = arith.constant 0 : i32
    return %arg0, %c0_i32 : i32, i32
  }
  func.func @transform_1(%arg0: i32) -> (i32, i32) {
    %c0_i32 = arith.constant 0 : i32
    %c0_i32_0 = arith.constant 0 : i32
    %c0_i32_1 = arith.constant 0 : i32
    return %c0_i32, %c0_i32_0 : i32, i32
  }
  func.func @transform_2(%arg0: i32) -> (i32, i32) {
    %c0_i32 = arith.constant 0 : i32
    %c0_i32_0 = arith.constant 0 : i32
    %c0_i32_1 = arith.constant 0 : i32
    return %c0_i32, %c0_i32_0 : i32, i32
  }
  func.func @transform_3(%arg0: i32) -> (i32, i32) {
    %c0_i32 = arith.constant 0 : i32
    %c0_i32_0 = arith.constant 0 : i32
    return %arg0, %c0_i32 : i32, i32
  }
}

</mosaic_0001>

<llo_original>
// kernel: projection_head.5
$region0: #{projection_head.5}
  #allocation0 [shape = 'u32[]', space=smem, size = 0x4, offset = 0x4, fixed_abs, tag = 'smem constant byte address 0x4 - core index']
  #allocation1 [shape = 'u32[144,128]{1,0:T(1,128)}', space=vmem, size = 0x12000, scoped, tag = 'internal scratch']
  %s0 = inlined_call_operand.vmem [shape: f32[512,128], index: 0, kind: input, shape index: {}]
  %s1 = inlined_call_operand.vmem [shape: f32[1,128], index: 1, kind: input, shape index: {}]
  %s2 = inlined_call_operand.vmem [shape: f32[1,128], index: 2, kind: input, shape index: {}]
  %s3 = inlined_call_operand.hbm [shape: f32[512,128], index: 3, kind: output, shape index: {}]
  %s4 = sld [smem:[#allocation0]]
  $region45: #{projection_head.5} parent=0
    _
  %s6 = ssub.s32 1, %s4
  %s7 = scalar_select 0, %s6, %s4
  $region1: #{projection_head.5} parent=0
    #allocation2 [shape = 'u8[131072]{0}', space=vmem, size = 0x20000, scoped, tag = 'output window, operand 0']
    #allocation3 [shape = 's32[2]{0}', space=sflag, size = 0x8, scoped, tag = 'scoped memory for projection_head.5']
    %8 = vsyncpa [#allocation3], 0
    %s9 = scalar_lea.sflag [#allocation3], 1
    %10 = vsyncpa %s9, 0
    loop: start=0, step=1, limit=6
    $region2: #{projection_head.5} parent=1 // loop_pre_header
      _
    $region3: #{projection_head.5} parent=1 // loop_header
      %s12 = sphi 0, %s16
      %p13 = scmp.ge.s32.totalorder %s12, 6
      %s22 = sphi 0, %s24
      %s25 = sphi 0, %s22
      %s26 = sphi 0, %s25
      %s42 = sphi 0, %s26
      %s46 = sphi 0, %s46
      %s48 = sphi 0, %s46
      %s49 = sphi 0, %s48
      %s63 = sphi 0, %s49
      %s67 = sphi 0, %s67
      %s69 = sphi 0, %s67
      %s70 = sphi 0, %s69
      %s84 = sphi 0, %s70
      %s90 = sphi 0, %s92
      %s93 = sphi 0, %s90
      %s94 = sphi 0, %s93
      %s110 = sphi 0, %s94
    $region4: #{projection_head.5} parent=1 // loop_header_branch
      %15 = sbr.rel (%p13) target = $region8
    $region5: #{projection_head.5} parent=1 // loop_body
      %s17 = ssub.s32 %s12, 1
      %s18 = ssub.s32 %s12, 2
      %s19 = sadd.s32 %s12, 1
      %s20 = ssub.s32 %s12, %s19
      %p21 = scmp.eq.s32.totalorder %s20, 0
      %s23 = sadd.s32 %s22, 1
      %s24 = scalar_select %p21, %s22, %s23
      %p27 = pneg %p21
      %p28 = scmp.eq.s32.totalorder %s12, 3
      %p29 = por %p27, %p28
      %p30 = scmp.ne.s32.totalorder %s22, %s25
      %p31 = scmp.eq.s32.totalorder %s12, 0
      %p32 = por %p30, %p31
      %p33 = scmp.ne.s32.totalorder %s22, %s25
      %p34 = scmp.eq.s32.totalorder %s17, 3
      %p35 = por %p33, %p34
      %p36 = scmp.ne.s32.totalorder %s25, %s26
      %p37 = scmp.eq.s32.totalorder %s17, 0
      %p38 = por %p36, %p37
      %p39 = scmp.ne.s32.totalorder %s25, %s26
      %p40 = scmp.eq.s32.totalorder %s18, 3
      %p41 = por %p39, %p40
      %p43 = scmp.ne.s32.totalorder %s26, %s42
      %p44 = scmp.eq.s32.totalorder %s18, 0
      %p45 = por %p43, %p44
      %s47 = sadd.s32 %s46, 1
      %p50 = scmp.eq.s32.totalorder %s12, 3
      %p51 = scmp.ne.s32.totalorder %s46, %s48
      %p52 = scmp.eq.s32.totalorder %s12, 0
      %p53 = por %p51, %p52
      %p54 = scmp.ne.s32.totalorder %s46, %s48
      %p55 = scmp.eq.s32.totalorder %s17, 3
      %p56 = por %p54, %p55
      %p57 = scmp.ne.s32.totalorder %s48, %s49
      %p58 = scmp.eq.s32.totalorder %s17, 0
      %p59 = por %p57, %p58
      %p60 = scmp.ne.s32.totalorder %s48, %s49
      %p61 = scmp.eq.s32.totalorder %s18, 3
      %p62 = por %p60, %p61
      %p64 = scmp.ne.s32.totalorder %s49, %s63
      %p65 = scmp.eq.s32.totalorder %s18, 0
      %p66 = por %p64, %p65
      %s68 = sadd.s32 %s67, 1
      %p71 = scmp.eq.s32.totalorder %s12, 3
      %p72 = scmp.ne.s32.totalorder %s67, %s69
      %p73 = scmp.eq.s32.totalorder %s12, 0
      %p74 = por %p72, %p73
      %p75 = scmp.ne.s32.totalorder %s67, %s69
      %p76 = scmp.eq.s32.totalorder %s17, 3
      %p77 = por %p75, %p76
      %p78 = scmp.ne.s32.totalorder %s69, %s70
      %p79 = scmp.eq.s32.totalorder %s17, 0
      %p80 = por %p78, %p79
      %p81 = scmp.ne.s32.totalorder %s69, %s70
      %p82 = scmp.eq.s32.totalorder %s18, 3
      %p83 = por %p81, %p82
      %p85 = scmp.ne.s32.totalorder %s70, %s84
      %p86 = scmp.eq.s32.totalorder %s18, 0
      %p87 = por %p85, %p86
      %s88 = ssub.s32 %s12, %s19
      %p89 = scmp.eq.s32.totalorder %s88, 0
      %s91 = sadd.s32 %s90, 1
      %s92 = scalar_select %p89, %s90, %s91
      %p95 = pneg %p89
      %p96 = scmp.eq.s32.totalorder %s12, 3
      %p97 = por %p95, %p96
      %p98 = scmp.ne.s32.totalorder %s90, %s93
      %p99 = scmp.eq.s32.totalorder %s12, 0
      %p100 = por %p98, %p99
      %p101 = scmp.ne.s32.totalorder %s90, %s93
      %p102 = scmp.eq.s32.totalorder %s17, 3
      %p103 = por %p101, %p102
      %p104 = scmp.ne.s32.totalorder %s93, %s94
      %p105 = scmp.eq.s32.totalorder %s17, 0
      %p106 = por %p104, %p105
      %p107 = scmp.ne.s32.totalorder %s93, %s94
      %p108 = scmp.eq.s32.totalorder %s18, 3
      %p109 = por %p107, %p108
      %p111 = scmp.ne.s32.totalorder %s94, %s110
      %p112 = scmp.eq.s32.totalorder %s18, 0
      %p113 = por %p111, %p112
      %p114 = scmp.le.s32.totalorder 1, %s12
      %p115 = scmp.lt.s32.totalorder %s12, 5
      %p116 = pnand %p114, %p115
      %p117 = pneg %p116
      // Predicated region
      $region9: #{projection_head.5} parent=5 // pred_check
        _
      $region10: #{projection_head.5} parent=5 // pred_check_branch
        %119 = sbr.rel (%p116) target = $region12
      $region11: #{projection_head.5} parent=5 // pred_region
        %s120 = ssub.s32 %s12, 1
        // Predicated region
        $region13: #{projection_head.5} parent=11 // pred_check
          %p121 = pneg %p59
        $region14: #{projection_head.5} parent=11 // pred_check_branch
          %123 = sbr.rel (%p121) target = $region16
        $region15: #{projection_head.5} parent=11 // pred_region
          _
        $region16: #{projection_head.5} parent=11 // pred_fallthru
          _
        // Predicated region
        $region17: #{projection_head.5} parent=11 // pred_check
          %p124 = pneg %p80
        $region18: #{projection_head.5} parent=11 // pred_check_branch
          %126 = sbr.rel (%p124) target = $region20
        $region19: #{projection_head.5} parent=11 // pred_region
          _
        $region20: #{projection_head.5} parent=11 // pred_fallthru
          _
      $region12: #{projection_head.5} parent=5 // pred_fallthru
        _
      %p127 = scmp.lt.s32.totalorder %s12, 4
      // Predicated region
      $region21: #{projection_head.5} parent=5 // pred_check
        %p128 = pneg %p127
      $region22: #{projection_head.5} parent=5 // pred_check_branch
        %130 = sbr.rel (%p128) target = $region24
      $region23: #{projection_head.5} parent=5 // pred_region
        // Predicated region
        $region25: #{projection_head.5} parent=23 // pred_check
          %p131 = pneg %p32
        $region26: #{projection_head.5} parent=23 // pred_check_branch
          %133 = sbr.rel (%p131) target = $region28
        $region27: #{projection_head.5} parent=23 // pred_region
          %s134 = smul.u32 16, %s12
          %p135 = scmp.lt.s32.totalorder %s134, 63
          %s136 = scalar_select %p135, %s134, 63
          %s137 = smul.addr %s136, 8
          %s138 = scalar_lea.vmem %s0, %s137
          %s139 = smul.u32 16, %s12
        $region28: #{projection_head.5} parent=23 // pred_fallthru
          _
      $region24: #{projection_head.5} parent=5 // pred_fallthru
        _
      %p140 = scmp.le.s32.totalorder 1, %s12
      %p141 = scmp.lt.s32.totalorder %s12, 5
      %p142 = pnand %p140, %p141
      %p143 = pneg %p142
      // Predicated region
      $region29: #{projection_head.5} parent=5 // pred_check
        _
      $region30: #{projection_head.5} parent=5 // pred_check_branch
        %145 = sbr.rel (%p142) target = $region32
      $region31: #{projection_head.5} parent=5 // pred_region
        %s146 = ssub.s32 %s12, 1
        %s147 = smul.u32 16, %s17
        %p148 = scmp.lt.s32.totalorder %s147, 63
        %s149 = scalar_select %p148, %s147, 63
        %s150 = smul.addr %s149, 8
        %s151 = scalar_lea.vmem %s0, %s150
        %p152 = pneg %p38
        %p153 = pneg %p35
        %p154 = pneg %p59
        %p155 = pneg %p56
        %p156 = pneg %p80
        %p157 = pneg %p77
        %p158 = pneg %p106
        %p159 = pneg %p103
        %s160 = sand.u32 %s93, 1
        %s161 = scalar_lea.sflag [#allocation3], %s160
        %s162 = sand.u32 %s93, 1
        %s163 = smul.addr %s162, 128
        %s164 = scalar_lea.vmem [#allocation2], %s163
        %s165 = smul.u32 16, %s17
        %p166 = scmp.lt.s32.totalorder %s165, 63
        %s167 = scalar_select %p166, %s165, 63
        %s168 = smul.addr %s167, 8
        %s169 = scalar_lea.vmem %s0, %s168
        %s170 = smul.u32 16, %s17
        %s171 = smul.u32 16, %s17
        %v172 = vld [vmem:[%s169] sm:$0xff]
        %v173 = vld [vmem:[%s169 + $0x8] sm:$0xff]
        %v174 = vld [vmem:[%s169 + $0x10] sm:$0xff]
        %v175 = vld [vmem:[%s169 + $0x18] sm:$0xff]
        %v176 = vld [vmem:[%s169 + $0x20] sm:$0xff]
        %v177 = vld [vmem:[%s169 + $0x28] sm:$0xff]
        %v178 = vld [vmem:[%s169 + $0x30] sm:$0xff]
        %v179 = vld [vmem:[%s169 + $0x38] sm:$0xff]
        %v180 = vld [vmem:[%s169 + $0x40] sm:$0xff]
        %v181 = vld [vmem:[%s169 + $0x48] sm:$0xff]
        %v182 = vld [vmem:[%s169 + $0x50] sm:$0xff]
        %v183 = vld [vmem:[%s169 + $0x58] sm:$0xff]
        %v184 = vld [vmem:[%s169 + $0x60] sm:$0xff]
        %v185 = vld [vmem:[%s169 + $0x68] sm:$0xff]
        %v186 = vld [vmem:[%s169 + $0x70] sm:$0xff]
        %v187 = vld [vmem:[%s169 + $0x78] sm:$0xff]
        %v188 = vld [vmem:[%s1] sm:$0x1]
        %v190 = vlaneseq
        %v191 = vshrl.u32 %v190, 7
        %v192 = vsub.s32 0, %v191
        %v193 = vrot.slane %v188, %v192
        %v195 = vmul.f32 %v172, %v193
        %v196 = vmul.f32 %v173, %v193
        %v197 = vmul.f32 %v174, %v193
        %v198 = vmul.f32 %v175, %v193
        %v199 = vmul.f32 %v176, %v193
        %v200 = vmul.f32 %v177, %v193
        %v201 = vmul.f32 %v178, %v193
        %v202 = vmul.f32 %v179, %v193
        %v203 = vmul.f32 %v180, %v193
        %v204 = vmul.f32 %v181, %v193
        %v205 = vmul.f32 %v182, %v193
        %v206 = vmul.f32 %v183, %v193
        %v207 = vmul.f32 %v184, %v193
        %v208 = vmul.f32 %v185, %v193
        %v209 = vmul.f32 %v186, %v193
        %v210 = vmul.f32 %v187, %v193
        %v211 = vld [vmem:[%s2] sm:$0x1]
        %v213 = vlaneseq
        %v214 = vshrl.u32 %v213, 7
        %v215 = vsub.s32 0, %v214
        %v216 = vrot.slane %v211, %v215
        %v218 = vadd.f32 %v195, %v216
        %v219 = vadd.f32 %v196, %v216
        %v220 = vadd.f32 %v197, %v216
        %v221 = vadd.f32 %v198, %v216
        %v222 = vadd.f32 %v199, %v216
        %v223 = vadd.f32 %v200, %v216
        %v224 = vadd.f32 %v201, %v216
        %v225 = vadd.f32 %v202, %v216
        %v226 = vadd.f32 %v203, %v216
        %v227 = vadd.f32 %v204, %v216
        %v228 = vadd.f32 %v205, %v216
        %v229 = vadd.f32 %v206, %v216
        %v230 = vadd.f32 %v207, %v216
        %v231 = vadd.f32 %v208, %v216
        %v232 = vadd.f32 %v209, %v216
        %v233 = vadd.f32 %v210, %v216
        %234 = vst [vmem:[%s164] sm:$0xff] %v218
        %235 = vst [vmem:[%s164 + $0x8] sm:$0xff] %v219
        %236 = vst [vmem:[%s164 + $0x10] sm:$0xff] %v220
        %237 = vst [vmem:[%s164 + $0x18] sm:$0xff] %v221
        %238 = vst [vmem:[%s164 + $0x20] sm:$0xff] %v222
        %239 = vst [vmem:[%s164 + $0x28] sm:$0xff] %v223
        %240 = vst [vmem:[%s164 + $0x30] sm:$0xff] %v224
        %241 = vst [vmem:[%s164 + $0x38] sm:$0xff] %v225
        %242 = vst [vmem:[%s164 + $0x40] sm:$0xff] %v226
        %243 = vst [vmem:[%s164 + $0x48] sm:$0xff] %v227
        %244 = vst [vmem:[%s164 + $0x50] sm:$0xff] %v228
        %245 = vst [vmem:[%s164 + $0x58] sm:$0xff] %v229
        %246 = vst [vmem:[%s164 + $0x60] sm:$0xff] %v230
        %247 = vst [vmem:[%s164 + $0x68] sm:$0xff] %v231
        %248 = vst [vmem:[%s164 + $0x70] sm:$0xff] %v232
        %249 = vst [vmem:[%s164 + $0x78] sm:$0xff] %v233
        %s250 = sand.u32 %s93, 1
        %s251 = scalar_lea.sflag [#allocation3], %s250
        %s252 = sand.u32 %s93, 1
        %s253 = smul.addr %s252, 128
        %s254 = scalar_lea.vmem [#allocation2], %s253
        // Predicated region
        $region33: #{projection_head.5} parent=31 // pred_check
          %p255 = pneg %p103
        $region34: #{projection_head.5} parent=31 // pred_check_branch
          %257 = sbr.rel (%p255) target = $region36
        $region35: #{projection_head.5} parent=31 // pred_region
          %s258 = smul.u32 16, %s17
          %s260 = ssub.s32 2048, 2048
          %261 = vsyncadd %s251, %s260
          %s262 = smul.addr %s258, 128
          %s263 = scalar_lea.hbm %s3, %s262
          %s264 = sshll.u32 %s254, 4
          %s265 = int_to_ptr.vmem [resolvable:$true] %s264
          %270 = dma.vmem_to_hbm [thread:$0]  %s265, 2048, %s263, %s251, 128, 128, 8
        $region36: #{projection_head.5} parent=31 // pred_fallthru
          _
      $region32: #{projection_head.5} parent=5 // pred_fallthru
        _
      %p271 = scmp.le.s32.totalorder 2, %s12
      // Predicated region
      $region37: #{projection_head.5} parent=5 // pred_check
        %p272 = pneg %p271
      $region38: #{projection_head.5} parent=5 // pred_check_branch
        %274 = sbr.rel (%p272) target = $region40
      $region39: #{projection_head.5} parent=5 // pred_region
        %s275 = ssub.s32 %s12, 2
        // Predicated region
        $region41: #{projection_head.5} parent=39 // pred_check
          %p276 = pneg %p109
        $region42: #{projection_head.5} parent=39 // pred_check_branch
          %278 = sbr.rel (%p276) target = $region44
        $region43: #{projection_head.5} parent=39 // pred_region
          %s279 = sand.u32 %s94, 1
          %s280 = scalar_lea.sflag [#allocation3], %s279
          %s281 = sand.u32 %s94, 1
          %s282 = smul.addr %s281, 128
          %s283 = scalar_lea.vmem [#allocation2], %s282
          %284 = dma.done %s280, 2048
        $region44: #{projection_head.5} parent=39 // pred_fallthru
          _
      $region40: #{projection_head.5} parent=5 // pred_fallthru
        _
    $region6: #{projection_head.5} parent=1 // loop_footer
      %s16 = sadd.s32 1, %s12
    $region7: #{projection_head.5} parent=1 // loop_footer_branch
      %11 = sbr.rel target = $region3
    $region8: #{projection_head.5} parent=1 // loop_exit
      _
    %285 = vsyncpa [#allocation3], 1
    %s286 = scalar_lea.sflag [#allocation3], 1
    %287 = vsyncpa %s286, 1

// kernel: projection_head.4
$region0: #{projection_head.4}
  #allocation0 [shape = 'u32[]', space=smem, size = 0x4, offset = 0x4, fixed_abs, tag = 'smem constant byte address 0x4 - core index']
  #allocation1 [shape = 'u32[144,128]{1,0:T(1,128)}', space=vmem, size = 0x12000, scoped, tag = 'internal scratch']
  %s0 = inlined_call_operand.vmem [shape: bf16[512,256], index: 0, kind: input, shape index: {}]
  %s1 = inlined_call_operand.vmem [shape: f32[1,256], index: 1, kind: input, shape index: {}]
  %s2 = inlined_call_operand.vmem [shape: f32[1,256], index: 2, kind: input, shape index: {}]
  %s3 = inlined_call_operand.vmem [shape: bf16[256,128], index: 3, kind: input, shape index: {}]
  %s4 = inlined_call_operand.vmem [shape: f32[512,128], index: 4, kind: output, shape index: {0}]
  %s5 = inlined_call_operand.vmem [shape: f32[1,128], index: 5, kind: output, shape index: {1}]
  %s6 = inlined_call_operand.vmem [shape: f32[1,128], index: 6, kind: output, shape index: {2}]
  %7 = xla_tuple %s4, %s5, %s6
  %s8 = sld [smem:[#allocation0]]
  $region69: #{projection_head.4} parent=0
    _
  %s10 = ssub.s32 1, %s8
  %s11 = scalar_select 0, %s10, %s8
  loop: start=0, step=1, limit=6
  $region2: #{projection_head.4} parent=0 // loop_pre_header
    _
  $region3: #{projection_head.4} parent=0 // loop_header
    %s13 = sphi 0, %s17
    %p14 = scmp.ge.s32.totalorder %s13, 6
    %s20 = sphi 0, %s32
    %s21 = sphi 0, %s28
    %s22 = sphi 0, %s20
    %s23 = sphi 0, %s21
    %s24 = sphi 0, %s22
    %s25 = sphi 0, %s23
    %s39 = sphi 0, %s41
    %s42 = sphi 0, %s39
    %s43 = sphi 0, %s42
    %s59 = sphi 0, %s43
    %s63 = sphi 0, %s63
    %s65 = sphi 0, %s63
    %s66 = sphi 0, %s65
    %s80 = sphi 0, %s66
    %s84 = sphi 0, %s84
    %s86 = sphi 0, %s84
    %s87 = sphi 0, %s86
    %s101 = sphi 0, %s87
    %s105 = sphi 0, %s105
    %s107 = sphi 0, %s105
    %s108 = sphi 0, %s107
    %s122 = sphi 0, %s108
    %s132 = sphi 0, %s134
    %s135 = sphi 0, %s132
    %s136 = sphi 0, %s135
    %s152 = sphi 0, %s136
    %s158 = sphi 0, %s160
    %s161 = sphi 0, %s158
    %s162 = sphi 0, %s161
    %s178 = sphi 0, %s162
    %s184 = sphi 0, %s186
    %s187 = sphi 0, %s184
    %s188 = sphi 0, %s187
    %s204 = sphi 0, %s188
  $region4: #{projection_head.4} parent=0 // loop_header_branch
    %16 = sbr.rel (%p14) target = $region8
  $region5: #{projection_head.4} parent=0 // loop_body
    %s18 = ssub.s32 %s13, 1
    %s19 = ssub.s32 %s13, 2
    %s26 = sadd.s32 1, %s21
    %p27 = scmp.ge.s32.totalorder %s26, 4
    %s28 = scalar_select %p27, 0, %s26
    %s29 = sadd.s32 1, %s20
    %s30 = scalar_select %p27, %s29, %s20
    %p31 = scmp.ge.s32.totalorder %s30, 1
    %s32 = scalar_select %p31, 0, %s30
    %s33 = smul.u32 %s20, 4
    %s34 = sadd.s32 %s33, %s21
    %s35 = smul.u32 %s32, 4
    %s36 = sadd.s32 %s35, %s28
    %s37 = ssub.s32 %s34, %s36
    %p38 = scmp.eq.s32.totalorder %s37, 0
    %s40 = sadd.s32 %s39, 1
    %s41 = scalar_select %p38, %s39, %s40
    %p44 = pneg %p38
    %p45 = scmp.eq.s32.totalorder %s13, 3
    %p46 = por %p44, %p45
    %p47 = scmp.ne.s32.totalorder %s39, %s42
    %p48 = scmp.eq.s32.totalorder %s13, 0
    %p49 = por %p47, %p48
    %p50 = scmp.ne.s32.totalorder %s39, %s42
    %p51 = scmp.eq.s32.totalorder %s18, 3
    %p52 = por %p50, %p51
    %p53 = scmp.ne.s32.totalorder %s42, %s43
    %p54 = scmp.eq.s32.totalorder %s18, 0
    %p55 = por %p53, %p54
    %p56 = scmp.ne.s32.totalorder %s42, %s43
    %p57 = scmp.eq.s32.totalorder %s19, 3
    %p58 = por %p56, %p57
    %p60 = scmp.ne.s32.totalorder %s43, %s59
    %p61 = scmp.eq.s32.totalorder %s19, 0
    %p62 = por %p60, %p61
    %s64 = sadd.s32 %s63, 1
    %p67 = scmp.eq.s32.totalorder %s13, 3
    %p68 = scmp.ne.s32.totalorder %s63, %s65
    %p69 = scmp.eq.s32.totalorder %s13, 0
    %p70 = por %p68, %p69
    %p71 = scmp.ne.s32.totalorder %s63, %s65
    %p72 = scmp.eq.s32.totalorder %s18, 3
    %p73 = por %p71, %p72
    %p74 = scmp.ne.s32.totalorder %s65, %s66
    %p75 = scmp.eq.s32.totalorder %s18, 0
    %p76 = por %p74, %p75
    %p77 = scmp.ne.s32.totalorder %s65, %s66
    %p78 = scmp.eq.s32.totalorder %s19, 3
    %p79 = por %p77, %p78
    %p81 = scmp.ne.s32.totalorder %s66, %s80
    %p82 = scmp.eq.s32.totalorder %s19, 0
    %p83 = por %p81, %p82
    %s85 = sadd.s32 %s84, 1
    %p88 = scmp.eq.s32.totalorder %s13, 3
    %p89 = scmp.ne.s32.totalorder %s84, %s86
    %p90 = scmp.eq.s32.totalorder %s13, 0
    %p91 = por %p89, %p90
    %p92 = scmp.ne.s32.totalorder %s84, %s86
    %p93 = scmp.eq.s32.totalorder %s18, 3
    %p94 = por %p92, %p93
    %p95 = scmp.ne.s32.totalorder %s86, %s87
    %p96 = scmp.eq.s32.totalorder %s18, 0
    %p97 = por %p95, %p96
    %p98 = scmp.ne.s32.totalorder %s86, %s87
    %p99 = scmp.eq.s32.totalorder %s19, 3
    %p100 = por %p98, %p99
    %p102 = scmp.ne.s32.totalorder %s87, %s101
    %p103 = scmp.eq.s32.totalorder %s19, 0
    %p104 = por %p102, %p103
    %s106 = sadd.s32 %s105, 1
    %p109 = scmp.eq.s32.totalorder %s13, 3
    %p110 = scmp.ne.s32.totalorder %s105, %s107
    %p111 = scmp.eq.s32.totalorder %s13, 0
    %p112 = por %p110, %p111
    %p113 = scmp.ne.s32.totalorder %s105, %s107
    %p114 = scmp.eq.s32.totalorder %s18, 3
    %p115 = por %p113, %p114
    %p116 = scmp.ne.s32.totalorder %s107, %s108
    %p117 = scmp.eq.s32.totalorder %s18, 0
    %p118 = por %p116, %p117
    %p119 = scmp.ne.s32.totalorder %s107, %s108
    %p120 = scmp.eq.s32.totalorder %s19, 3
    %p121 = por %p119, %p120
    %p123 = scmp.ne.s32.totalorder %s108, %s122
    %p124 = scmp.eq.s32.totalorder %s19, 0
    %p125 = por %p123, %p124
    %s126 = smul.u32 %s20, 4
    %s127 = sadd.s32 %s126, %s21
    %s128 = smul.u32 %s32, 4
    %s129 = sadd.s32 %s128, %s28
    %s130 = ssub.s32 %s127, %s129
    %p131 = scmp.eq.s32.totalorder %s130, 0
    %s133 = sadd.s32 %s132, 1
    %s134 = scalar_select %p131, %s132, %s133
    %p137 = pneg %p131
    %p138 = scmp.eq.s32.totalorder %s13, 3
    %p139 = por %p137, %p138
    %p140 = scmp.ne.s32.totalorder %s132, %s135
    %p141 = scmp.eq.s32.totalorder %s13, 0
    %p142 = por %p140, %p141
    %p143 = scmp.ne.s32.totalorder %s132, %s135
    %p144 = scmp.eq.s32.totalorder %s18, 3
    %p145 = por %p143, %p144
    %p146 = scmp.ne.s32.totalorder %s135, %s136
    %p147 = scmp.eq.s32.totalorder %s18, 0
    %p148 = por %p146, %p147
    %p149 = scmp.ne.s32.totalorder %s135, %s136
    %p150 = scmp.eq.s32.totalorder %s19, 3
    %p151 = por %p149, %p150
    %p153 = scmp.ne.s32.totalorder %s136, %s152
    %p154 = scmp.eq.s32.totalorder %s19, 0
    %p155 = por %p153, %p154
    %s156 = ssub.s32 %s20, %s32
    %p157 = scmp.eq.s32.totalorder %s156, 0
    %s159 = sadd.s32 %s158, 1
    %s160 = scalar_select %p157, %s158, %s159
    %p163 = pneg %p157
    %p164 = scmp.eq.s32.totalorder %s13, 3
    %p165 = por %p163, %p164
    %p166 = scmp.ne.s32.totalorder %s158, %s161
    %p167 = scmp.eq.s32.totalorder %s13, 0
    %p168 = por %p166, %p167
    %p169 = scmp.ne.s32.totalorder %s158, %s161
    %p170 = scmp.eq.s32.totalorder %s18, 3
    %p171 = por %p169, %p170
    %p172 = scmp.ne.s32.totalorder %s161, %s162
    %p173 = scmp.eq.s32.totalorder %s18, 0
    %p174 = por %p172, %p173
    %p175 = scmp.ne.s32.totalorder %s161, %s162
    %p176 = scmp.eq.s32.totalorder %s19, 3
    %p177 = por %p175, %p176
    %p179 = scmp.ne.s32.totalorder %s162, %s178
    %p180 = scmp.eq.s32.totalorder %s19, 0
    %p181 = por %p179, %p180
    %s182 = ssub.s32 %s20, %s32
    %p183 = scmp.eq.s32.totalorder %s182, 0
    %s185 = sadd.s32 %s184, 1
    %s186 = scalar_select %p183, %s184, %s185
    %p189 = pneg %p183
    %p190 = scmp.eq.s32.totalorder %s13, 3
    %p191 = por %p189, %p190
    %p192 = scmp.ne.s32.totalorder %s184, %s187
    %p193 = scmp.eq.s32.totalorder %s13, 0
    %p194 = por %p192, %p193
    %p195 = scmp.ne.s32.totalorder %s184, %s187
    %p196 = scmp.eq.s32.totalorder %s18, 3
    %p197 = por %p195, %p196
    %p198 = scmp.ne.s32.totalorder %s187, %s188
    %p199 = scmp.eq.s32.totalorder %s18, 0
    %p200 = por %p198, %p199
    %p201 = scmp.ne.s32.totalorder %s187, %s188
    %p202 = scmp.eq.s32.totalorder %s19, 3
    %p203 = por %p201, %p202
    %p205 = scmp.ne.s32.totalorder %s188, %s204
    %p206 = scmp.eq.s32.totalorder %s19, 0
    %p207 = por %p205, %p206
    %p208 = scmp.le.s32.totalorder 1, %s13
    %p209 = scmp.lt.s32.totalorder %s13, 5
    %p210 = pnand %p208, %p209
    %p211 = pneg %p210
    // Predicated region
    $region9: #{projection_head.4} parent=5 // pred_check
      _
    $region10: #{projection_head.4} parent=5 // pred_check_branch
      %213 = sbr.rel (%p210) target = $region12
    $region11: #{projection_head.4} parent=5 // pred_region
      %s214 = ssub.s32 %s13, 1
      // Predicated region
      $region13: #{projection_head.4} parent=11 // pred_check
        %p215 = pneg %p76
      $region14: #{projection_head.4} parent=11 // pred_check_branch
        %217 = sbr.rel (%p215) target = $region16
      $region15: #{projection_head.4} parent=11 // pred_region
        _
      $region16: #{projection_head.4} parent=11 // pred_fallthru
        _
      // Predicated region
      $region17: #{projection_head.4} parent=11 // pred_check
        %p218 = pneg %p97
      $region18: #{projection_head.4} parent=11 // pred_check_branch
        %220 = sbr.rel (%p218) target = $region20
      $region19: #{projection_head.4} parent=11 // pred_region
        _
      $region20: #{projection_head.4} parent=11 // pred_fallthru
        _
      // Predicated region
      $region21: #{projection_head.4} parent=11 // pred_check
        %p221 = pneg %p118
      $region22: #{projection_head.4} parent=11 // pred_check_branch
        %223 = sbr.rel (%p221) target = $region24
      $region23: #{projection_head.4} parent=11 // pred_region
        _
      $region24: #{projection_head.4} parent=11 // pred_fallthru
        _
    $region12: #{projection_head.4} parent=5 // pred_fallthru
      _
    %p224 = scmp.lt.s32.totalorder %s13, 4
    // Predicated region
    $region25: #{projection_head.4} parent=5 // pred_check
      %p225 = pneg %p224
    $region26: #{projection_head.4} parent=5 // pred_check_branch
      %227 = sbr.rel (%p225) target = $region28
    $region27: #{projection_head.4} parent=5 // pred_region
      // Predicated region
      $region29: #{projection_head.4} parent=27 // pred_check
        %p228 = pneg %p49
      $region30: #{projection_head.4} parent=27 // pred_check_branch
        %230 = sbr.rel (%p228) target = $region32
      $region31: #{projection_head.4} parent=27 // pred_region
        %s231 = smul.u32 %s20, 4
        %s232 = sadd.s32 %s231, %s21
        %s233 = smul.u32 16, %s232
        %p234 = scmp.lt.s32.totalorder %s233, 63
        %s235 = scalar_select %p234, %s233, 63
        %s236 = smul.addr %s235, 2
        %s237 = smul.addr %s236, 4
        %s238 = scalar_lea.vmem %s0, %s237
        %s239 = smul.u32 %s20, 4
        %s240 = sadd.s32 %s239, %s21
        %s241 = smul.u32 16, %s240
      $region32: #{projection_head.4} parent=27 // pred_fallthru
        _
    $region28: #{projection_head.4} parent=5 // pred_fallthru
      _
    %p242 = scmp.le.s32.totalorder 1, %s13
    %p243 = scmp.lt.s32.totalorder %s13, 5
    %p244 = pnand %p242, %p243
    %p245 = pneg %p244
    // Predicated region
    $region33: #{projection_head.4} parent=5 // pred_check
      _
    $region34: #{projection_head.4} parent=5 // pred_check_branch
      %247 = sbr.rel (%p244) target = $region36
    $region35: #{projection_head.4} parent=5 // pred_region
      %s248 = ssub.s32 %s13, 1
      %s249 = smul.u32 %s22, 4
      %s250 = sadd.s32 %s249, %s23
      %s251 = smul.u32 16, %s250
      %p252 = scmp.lt.s32.totalorder %s251, 63
      %s253 = scalar_select %p252, %s251, 63
      %s254 = smul.addr %s253, 2
      %s255 = smul.addr %s254, 4
      %s256 = scalar_lea.vmem %s0, %s255
      %p257 = pneg %p55
      %p258 = pneg %p52
      %p259 = pneg %p76
      %p260 = pneg %p73
      %p261 = pneg %p97
      %p262 = pneg %p94
      %p263 = pneg %p118
      %p264 = pneg %p115
      %p265 = pneg %p148
      %p266 = pneg %p145
      %s267 = smul.u32 %s22, 4
      %s268 = sadd.s32 %s267, %s23
      %s269 = smul.u32 16, %s268
      %p270 = scmp.lt.s32.totalorder %s269, 63
      %s271 = scalar_select %p270, %s269, 63
      %s272 = smul.addr %s271, 8
      %s273 = scalar_lea.vmem %s4, %s272
      %p274 = pneg %p174
      %p275 = pneg %p171
      %p276 = scmp.lt.s32.totalorder %s22, 0
      %s277 = scalar_select %p276, %s22, 0
      %s278 = scalar_lea.vmem %s5, %s277
      %p279 = pneg %p200
      %p280 = pneg %p197
      %p281 = scmp.lt.s32.totalorder %s22, 0
      %s282 = scalar_select %p281, %s22, 0
      %s283 = scalar_lea.vmem %s6, %s282
      %s284 = smul.u32 %s22, 4
      %s285 = sadd.s32 %s284, %s23
      %s286 = smul.u32 16, %s285
      %p287 = scmp.lt.s32.totalorder %s286, 63
      %s288 = scalar_select %p287, %s286, 63
      %s289 = smul.addr %s288, 2
      %s290 = smul.addr %s289, 4
      %s291 = scalar_lea.vmem %s0, %s290
      %s292 = smul.u32 %s22, 4
      %s293 = sadd.s32 %s292, %s23
      %s294 = smul.u32 16, %s293
      %s295 = smul.u32 %s22, 4
      %s296 = sadd.s32 %s295, %s23
      %s297 = smul.u32 16, %s296
      %p298 = scmp.lt.s32.totalorder %s297, 63
      %s299 = scalar_select %p298, %s297, 63
      %s300 = smul.addr %s299, 8
      %s301 = scalar_lea.vmem %s4, %s300
      %s302 = smul.u32 %s22, 4
      %s303 = sadd.s32 %s302, %s23
      %s304 = smul.u32 16, %s303
      %p305 = scmp.lt.s32.totalorder %s22, 0
      %s306 = scalar_select %p305, %s22, 0
      %s307 = scalar_lea.vmem %s5, %s306
      %p308 = scmp.lt.s32.totalorder %s22, 0
      %s309 = scalar_select %p308, %s22, 0
      %s310 = scalar_lea.vmem %s6, %s309
      %p312 = scmp.eq.s32.totalorder %s23, 0
      // Predicated region
      $region37: #{projection_head.4} parent=35 // pred_check
        %p313 = pneg %p312
      $region38: #{projection_head.4} parent=35 // pred_check_branch
        %315 = sbr.rel (%p313) target = $region40
      $region39: #{projection_head.4} parent=35 // pred_region
        %316 = vst [vmem:[%s307] sm:$0x1] 0.0
        %317 = vst [vmem:[%s310] sm:$0x1] 0.0
      $region40: #{projection_head.4} parent=35 // pred_fallthru
        _
      %v318 = vld [vmem:[%s291] sm:$0xff]
      %v319 = vld [vmem:[%s291 + $0x8] sm:$0xff]
      %v320 = vld [vmem:[%s291 + $0x10] sm:$0xff]
      %v321 = vld [vmem:[%s291 + $0x18] sm:$0xff]
      %v322 = vld [vmem:[%s291 + $0x20] sm:$0xff]
      %v323 = vld [vmem:[%s291 + $0x28] sm:$0xff]
      %v324 = vld [vmem:[%s291 + $0x30] sm:$0xff]
      %v325 = vld [vmem:[%s291 + $0x38] sm:$0xff]
      %v326 = vld [vmem:[%s291 + $0x40] sm:$0xff]
      %v327 = vld [vmem:[%s291 + $0x48] sm:$0xff]
      %v328 = vld [vmem:[%s291 + $0x50] sm:$0xff]
      %v329 = vld [vmem:[%s291 + $0x58] sm:$0xff]
      %v330 = vld [vmem:[%s291 + $0x60] sm:$0xff]
      %v331 = vld [vmem:[%s291 + $0x68] sm:$0xff]
      %v332 = vld [vmem:[%s291 + $0x70] sm:$0xff]
      %v333 = vld [vmem:[%s291 + $0x78] sm:$0xff]
      %v334 = vunpack.c.l.bf16 %v318
      %v335 = vunpack.c.h.bf16 %v318
      %v336 = vunpack.c.l.bf16 %v319
      %v337 = vunpack.c.h.bf16 %v319
      %v338 = vunpack.c.l.bf16 %v320
      %v339 = vunpack.c.h.bf16 %v320
      %v340 = vunpack.c.l.bf16 %v321
      %v341 = vunpack.c.h.bf16 %v321
      %v342 = vunpack.c.l.bf16 %v322
      %v343 = vunpack.c.h.bf16 %v322
      %v344 = vunpack.c.l.bf16 %v323
      %v345 = vunpack.c.h.bf16 %v323
      %v346 = vunpack.c.l.bf16 %v324
      %v347 = vunpack.c.h.bf16 %v324
      %v348 = vunpack.c.l.bf16 %v325
      %v349 = vunpack.c.h.bf16 %v325
      %v350 = vunpack.c.l.bf16 %v326
      %v351 = vunpack.c.h.bf16 %v326
      %v352 = vunpack.c.l.bf16 %v327
      %v353 = vunpack.c.h.bf16 %v327
      %v354 = vunpack.c.l.bf16 %v328
      %v355 = vunpack.c.h.bf16 %v328
      %v356 = vunpack.c.l.bf16 %v329
      %v357 = vunpack.c.h.bf16 %v329
      %v358 = vunpack.c.l.bf16 %v330
      %v359 = vunpack.c.h.bf16 %v330
      %v360 = vunpack.c.l.bf16 %v331
      %v361 = vunpack.c.h.bf16 %v331
      %v362 = vunpack.c.l.bf16 %v332
      %v363 = vunpack.c.h.bf16 %v332
      %v364 = vunpack.c.l.bf16 %v333
      %v365 = vunpack.c.h.bf16 %v333
      %v366 = vld [vmem:[%s1] sm:$0x3]
      %v368 = vlaneseq
      %v369 = vshrl.u32 %v368, 7
      %v370 = vsub.s32 0, %v369
      %v371 = vrot.slane %v366, %v370
      %v372 = vlaneseq
      %v373 = vshrl.u32 %v372, 7
      %v374 = vsub.s32 1, %v373
      %v375 = vrot.slane %v366, %v374
      %v378 = vmul.f32 %v334, %v371
      %v379 = vmul.f32 %v335, %v375
      %v380 = vmul.f32 %v336, %v371
      %v381 = vmul.f32 %v337, %v375
      %v382 = vmul.f32 %v338, %v371
      %v383 = vmul.f32 %v339, %v375
      %v384 = vmul.f32 %v340, %v371
      %v385 = vmul.f32 %v341, %v375
      %v386 = vmul.f32 %v342, %v371
      %v387 = vmul.f32 %v343, %v375
      %v388 = vmul.f32 %v344, %v371
      %v389 = vmul.f32 %v345, %v375
      %v390 = vmul.f32 %v346, %v371
      %v391 = vmul.f32 %v347, %v375
      %v392 = vmul.f32 %v348, %v371
      %v393 = vmul.f32 %v349, %v375
      %v394 = vmul.f32 %v350, %v371
      %v395 = vmul.f32 %v351, %v375
      %v396 = vmul.f32 %v352, %v371
      %v397 = vmul.f32 %v353, %v375
      %v398 = vmul.f32 %v354, %v371
      %v399 = vmul.f32 %v355, %v375
      %v400 = vmul.f32 %v356, %v371
      %v401 = vmul.f32 %v357, %v375
      %v402 = vmul.f32 %v358, %v371
      %v403 = vmul.f32 %v359, %v375
      %v404 = vmul.f32 %v360, %v371
      %v405 = vmul.f32 %v361, %v375
      %v406 = vmul.f32 %v362, %v371
      %v407 = vmul.f32 %v363, %v375
      %v408 = vmul.f32 %v364, %v371
      %v409 = vmul.f32 %v365, %v375
      %v410 = vld [vmem:[%s2] sm:$0x3]
      %v412 = vlaneseq
      %v413 = vshrl.u32 %v412, 7
      %v414 = vsub.s32 0, %v413
      %v415 = vrot.slane %v410, %v414
      %v416 = vlaneseq
      %v417 = vshrl.u32 %v416, 7
      %v418 = vsub.s32 1, %v417
      %v419 = vrot.slane %v410, %v418
      %v422 = vadd.f32 %v378, %v415
      %v423 = vadd.f32 %v379, %v419
      %v424 = vadd.f32 %v380, %v415
      %v425 = vadd.f32 %v381, %v419
      %v426 = vadd.f32 %v382, %v415
      %v427 = vadd.f32 %v383, %v419
      %v428 = vadd.f32 %v384, %v415
      %v429 = vadd.f32 %v385, %v419
      %v430 = vadd.f32 %v386, %v415
      %v431 = vadd.f32 %v387, %v419
      %v432 = vadd.f32 %v388, %v415
      %v433 = vadd.f32 %v389, %v419
      %v434 = vadd.f32 %v390, %v415
      %v435 = vadd.f32 %v391, %v419
      %v436 = vadd.f32 %v392, %v415
      %v437 = vadd.f32 %v393, %v419
      %v438 = vadd.f32 %v394, %v415
      %v439 = vadd.f32 %v395, %v419
      %v440 = vadd.f32 %v396, %v415
      %v441 = vadd.f32 %v397, %v419
      %v442 = vadd.f32 %v398, %v415
      %v443 = vadd.f32 %v399, %v419
      %v444 = vadd.f32 %v400, %v415
      %v445 = vadd.f32 %v401, %v419
      %v446 = vadd.f32 %v402, %v415
      %v447 = vadd.f32 %v403, %v419
      %v448 = vadd.f32 %v404, %v415
      %v449 = vadd.f32 %v405, %v419
      %v450 = vadd.f32 %v406, %v415
      %v451 = vadd.f32 %v407, %v419
      %v452 = vadd.f32 %v408, %v415
      %v453 = vadd.f32 %v409, %v419
      %v454 = vmax.f32 %v422, 0.0
      %v455 = vmax.f32 %v423, 0.0
      %v456 = vmax.f32 %v424, 0.0
      %v457 = vmax.f32 %v425, 0.0
      %v458 = vmax.f32 %v426, 0.0
      %v459 = vmax.f32 %v427, 0.0
      %v460 = vmax.f32 %v428, 0.0
      %v461 = vmax.f32 %v429, 0.0
      %v462 = vmax.f32 %v430, 0.0
      %v463 = vmax.f32 %v431, 0.0
      %v464 = vmax.f32 %v432, 0.0
      %v465 = vmax.f32 %v433, 0.0
      %v466 = vmax.f32 %v434, 0.0
      %v467 = vmax.f32 %v435, 0.0
      %v468 = vmax.f32 %v436, 0.0
      %v469 = vmax.f32 %v437, 0.0
      %v470 = vmax.f32 %v438, 0.0
      %v471 = vmax.f32 %v439, 0.0
      %v472 = vmax.f32 %v440, 0.0
      %v473 = vmax.f32 %v441, 0.0
      %v474 = vmax.f32 %v442, 0.0
      %v475 = vmax.f32 %v443, 0.0
      %v476 = vmax.f32 %v444, 0.0
      %v477 = vmax.f32 %v445, 0.0
      %v478 = vmax.f32 %v446, 0.0
      %v479 = vmax.f32 %v447, 0.0
      %v480 = vmax.f32 %v448, 0.0
      %v481 = vmax.f32 %v449, 0.0
      %v482 = vmax.f32 %v450, 0.0
      %v483 = vmax.f32 %v451, 0.0
      %v484 = vmax.f32 %v452, 0.0
      %v485 = vmax.f32 %v453, 0.0
      %v486 = vpack.c.bf16 %v456, %v454
      %v487 = vpack.c.bf16 %v457, %v455
      %v488 = vpack.c.bf16 %v460, %v458
      %v489 = vpack.c.bf16 %v461, %v459
      %v490 = vpack.c.bf16 %v464, %v462
      %v491 = vpack.c.bf16 %v465, %v463
      %v492 = vpack.c.bf16 %v468, %v466
      %v493 = vpack.c.bf16 %v469, %v467
      %v494 = vpack.c.bf16 %v472, %v470
      %v495 = vpack.c.bf16 %v473, %v471
      %v496 = vpack.c.bf16 %v476, %v474
      %v497 = vpack.c.bf16 %v477, %v475
      %v498 = vpack.c.bf16 %v480, %v478
      %v499 = vpack.c.bf16 %v481, %v479
      %v500 = vpack.c.bf16 %v484, %v482
      %v501 = vpack.c.bf16 %v485, %v483
      %v502 = vld [vmem:[%s3] sm:$0xf]
      %v503 = vld [vmem:[%s3 + $0x4] sm:$0xf]
      %v504 = vld [vmem:[%s3 + $0x8] sm:$0xf]
      %v505 = vld [vmem:[%s3 + $0xc] sm:$0xf]
      %v506 = vld [vmem:[%s3 + $0x10] sm:$0xf]
      %v507 = vld [vmem:[%s3 + $0x14] sm:$0xf]
      %v508 = vld [vmem:[%s3 + $0x18] sm:$0xf]
      %v509 = vld [vmem:[%s3 + $0x1c] sm:$0xf]
      %v510 = vld [vmem:[%s3 + $0x20] sm:$0xf]
      %v511 = vld [vmem:[%s3 + $0x24] sm:$0xf]
      %v512 = vld [vmem:[%s3 + $0x28] sm:$0xf]
      %v513 = vld [vmem:[%s3 + $0x2c] sm:$0xf]
      %v514 = vld [vmem:[%s3 + $0x30] sm:$0xf]
      %v515 = vld [vmem:[%s3 + $0x34] sm:$0xf]
      %v516 = vld [vmem:[%s3 + $0x38] sm:$0xf]
      %v517 = vld [vmem:[%s3 + $0x3c] sm:$0xf]
      %v518 = vld [vmem:[%s3 + $0x40] sm:$0xf]
      %v519 = vld [vmem:[%s3 + $0x44] sm:$0xf]
      %v520 = vld [vmem:[%s3 + $0x48] sm:$0xf]
      %v521 = vld [vmem:[%s3 + $0x4c] sm:$0xf]
      %v522 = vld [vmem:[%s3 + $0x50] sm:$0xf]
      %v523 = vld [vmem:[%s3 + $0x54] sm:$0xf]
      %v524 = vld [vmem:[%s3 + $0x58] sm:$0xf]
      %v525 = vld [vmem:[%s3 + $0x5c] sm:$0xf]
      %v526 = vld [vmem:[%s3 + $0x60] sm:$0xf]
      %v527 = vld [vmem:[%s3 + $0x64] sm:$0xf]
      %v528 = vld [vmem:[%s3 + $0x68] sm:$0xf]
      %v529 = vld [vmem:[%s3 + $0x6c] sm:$0xf]
      %v530 = vld [vmem:[%s3 + $0x70] sm:$0xf]
      %v531 = vld [vmem:[%s3 + $0x74] sm:$0xf]
      %v532 = vld [vmem:[%s3 + $0x78] sm:$0xf]
      %v533 = vld [vmem:[%s3 + $0x7c] sm:$0xf]
      %v566 = vunpack.c.l.b16 %v502
      %v567 = vunpack.c.l.b16 %v503
      %v568 = vunpack.c.l.b16 %v504
      %v569 = vunpack.c.l.b16 %v505
      %v570 = vunpack.c.l.b16 %v506
      %v571 = vunpack.c.l.b16 %v507
      %v572 = vunpack.c.l.b16 %v508
      %v573 = vunpack.c.l.b16 %v509
      %v574 = vunpack.c.l.b16 %v510
      %v575 = vunpack.c.l.b16 %v511
      %v576 = vunpack.c.l.b16 %v512
      %v577 = vunpack.c.l.b16 %v513
      %v578 = vunpack.c.l.b16 %v514
      %v579 = vunpack.c.l.b16 %v515
      %v580 = vunpack.c.l.b16 %v516
      %v581 = vunpack.c.l.b16 %v517
      %v582 = vunpack.c.l.b16 %v518
      %v583 = vunpack.c.l.b16 %v519
      %v584 = vunpack.c.l.b16 %v520
      %v585 = vunpack.c.l.b16 %v521
      %v586 = vunpack.c.l.b16 %v522
      %v587 = vunpack.c.l.b16 %v523
      %v588 = vunpack.c.l.b16 %v524
      %v589 = vunpack.c.l.b16 %v525
      %v590 = vunpack.c.l.b16 %v526
      %v591 = vunpack.c.l.b16 %v527
      %v592 = vunpack.c.l.b16 %v528
      %v593 = vunpack.c.l.b16 %v529
      %v594 = vunpack.c.l.b16 %v530
      %v595 = vunpack.c.l.b16 %v531
      %v596 = vunpack.c.l.b16 %v532
      %v597 = vunpack.c.l.b16 %v533
      %v598 = vpack.c.b16 %v567, %v566
      %v599 = vpack.c.b16 %v569, %v568
      %v600 = vpack.c.b16 %v571, %v570
      %v601 = vpack.c.b16 %v573, %v572
      %v602 = vpack.c.b16 %v575, %v574
      %v603 = vpack.c.b16 %v577, %v576
      %v604 = vpack.c.b16 %v579, %v578
      %v605 = vpack.c.b16 %v581, %v580
      %v606 = vpack.c.b16 %v583, %v582
      %v607 = vpack.c.b16 %v585, %v584
      %v608 = vpack.c.b16 %v587, %v586
      %v609 = vpack.c.b16 %v589, %v588
      %v610 = vpack.c.b16 %v591, %v590
      %v611 = vpack.c.b16 %v593, %v592
      %v612 = vpack.c.b16 %v595, %v594
      %v613 = vpack.c.b16 %v597, %v596
      %630 = vmatprep.subr.bf16.mxu0 0
      %631 = vmatpush1.bf16.msra.mxu0 %v605
      %632 = vmatprep.subr.bf16.mxu0 0
      %633 = vmatpush1.bf16.msra.mxu0 %v604
      %634 = vmatprep.subr.bf16.mxu0 0
      %635 = vmatpush1.bf16.msra.mxu0 %v603
      %636 = vmatprep.subr.bf16.mxu0 0
      %637 = vmatpush1.bf16.msra.mxu0 %v602
      %638 = vmatprep.subr.bf16.mxu0 0
      %639 = vmatpush1.bf16.msra.mxu0 %v601
      %640 = vmatprep.subr.bf16.mxu0 0
      %641 = vmatpush1.bf16.msra.mxu0 %v600
      %642 = vmatprep.subr.bf16.mxu0 0
      %643 = vmatpush1.bf16.msra.mxu0 %v599
      %644 = vmatprep.subr.bf16.mxu0 0
      %645 = vmatpush1.bf16.msra.mxu0 %v598
      %646 = vmatprep.subr.bf16.mxu0 0
      %647 = vmatpush2.bf16.msra.mxu0 %v613
      %648 = vmatprep.subr.bf16.mxu0 0
      %649 = vmatpush2.bf16.msra.mxu0 %v612
      %650 = vmatprep.subr.bf16.mxu0 0
      %651 = vmatpush2.bf16.msra.mxu0 %v611
      %652 = vmatprep.subr.bf16.mxu0 0
      %653 = vmatpush2.bf16.msra.mxu0 %v610
      %654 = vmatprep.subr.bf16.mxu0 0
      %655 = vmatpush2.bf16.msra.mxu0 %v609
      %656 = vmatprep.subr.bf16.mxu0 0
      %657 = vmatpush2.bf16.msra.mxu0 %v608
      %658 = vmatprep.subr.bf16.mxu0 0
      %659 = vmatpush2.bf16.msra.mxu0 %v607
      %660 = vmatprep.subr.bf16.mxu0 0
      %661 = vmatpush2.bf16.msra.mxu0 %v606
      %662 = vmatprep.mubr.bf16.mxu0 %v487
      %663 = vmatmul.mubr.bf16.gmra.mxu0 %v486
      %v664 = vpop.f32.mrf.mxu0
      %v665 = vadd.f32 0.0, %v664
      %v666 = vpop.f32.mrf.mxu0
      %v667 = vpop.f32.mrf.mxu0
      %v668 = vadd.f32 0.0, %v667
      %v669 = vpop.f32.mrf.mxu0
      %670 = vmatprep.mubr.bf16.mxu0 %v489
      %671 = vmatmul.mubr.bf16.gmra.mxu0 %v488
      %v672 = vpop.f32.mrf.mxu0
      %v673 = vadd.f32 0.0, %v672
      %v674 = vpop.f32.mrf.mxu0
      %v675 = vpop.f32.mrf.mxu0
      %v676 = vadd.f32 0.0, %v675
      %v677 = vpop.f32.mrf.mxu0
      %678 = vmatprep.mubr.bf16.mxu0 %v491
      %679 = vmatmul.mubr.bf16.gmra.mxu0 %v490
      %v680 = vpop.f32.mrf.mxu0
      %v681 = vadd.f32 0.0, %v680
      %v682 = vpop.f32.mrf.mxu0
      %v683 = vpop.f32.mrf.mxu0
      %v684 = vadd.f32 0.0, %v683
      %v685 = vpop.f32.mrf.mxu0
      %686 = vmatprep.mubr.bf16.mxu0 %v493
      %687 = vmatmul.mubr.bf16.gmra.mxu0 %v492
      %v688 = vpop.f32.mrf.mxu0
      %v689 = vadd.f32 0.0, %v688
      %v690 = vpop.f32.mrf.mxu0
      %v691 = vpop.f32.mrf.mxu0
      %v692 = vadd.f32 0.0, %v691
      %v693 = vpop.f32.mrf.mxu0
      %694 = vmatprep.mubr.bf16.mxu0 %v495
      %695 = vmatmul.mubr.bf16.gmra.mxu0 %v494
      %v696 = vpop.f32.mrf.mxu0
      %v697 = vadd.f32 0.0, %v696
      %v698 = vpop.f32.mrf.mxu0
      %v699 = vpop.f32.mrf.mxu0
      %v700 = vadd.f32 0.0, %v699
      %v701 = vpop.f32.mrf.mxu0
      %702 = vmatprep.mubr.bf16.mxu0 %v497
      %703 = vmatmul.mubr.bf16.gmra.mxu0 %v496
      %v704 = vpop.f32.mrf.mxu0
      %v705 = vadd.f32 0.0, %v704
      %v706 = vpop.f32.mrf.mxu0
      %v707 = vpop.f32.mrf.mxu0
      %v708 = vadd.f32 0.0, %v707
      %v709 = vpop.f32.mrf.mxu0
      %710 = vmatprep.mubr.bf16.mxu0 %v499
      %711 = vmatmul.mubr.bf16.gmra.mxu0 %v498
      %v712 = vpop.f32.mrf.mxu0
      %v713 = vadd.f32 0.0, %v712
      %v714 = vpop.f32.mrf.mxu0
      %v715 = vpop.f32.mrf.mxu0
      %v716 = vadd.f32 0.0, %v715
      %v717 = vpop.f32.mrf.mxu0
      %718 = vmatprep.mubr.bf16.mxu0 %v501
      %719 = vmatmul.mubr.bf16.gmra.mxu0 %v500
      %v720 = vpop.f32.mrf.mxu0
      %v721 = vadd.f32 0.0, %v720
      %v722 = vpop.f32.mrf.mxu0
      %v723 = vpop.f32.mrf.mxu0
      %v724 = vadd.f32 0.0, %v723
      %v725 = vpop.f32.mrf.mxu0
      %726 = vdwg.mxu0
      %727 = vst [vmem:[%s301] sm:$0xff] %v665
      %728 = vst [vmem:[%s301 + $0x8] sm:$0xff] %v668
      %729 = vst [vmem:[%s301 + $0x10] sm:$0xff] %v673
      %730 = vst [vmem:[%s301 + $0x18] sm:$0xff] %v676
      %731 = vst [vmem:[%s301 + $0x20] sm:$0xff] %v681
      %732 = vst [vmem:[%s301 + $0x28] sm:$0xff] %v684
      %733 = vst [vmem:[%s301 + $0x30] sm:$0xff] %v689
      %734 = vst [vmem:[%s301 + $0x38] sm:$0xff] %v692
      %735 = vst [vmem:[%s301 + $0x40] sm:$0xff] %v697
      %736 = vst [vmem:[%s301 + $0x48] sm:$0xff] %v700
      %737 = vst [vmem:[%s301 + $0x50] sm:$0xff] %v705
      %738 = vst [vmem:[%s301 + $0x58] sm:$0xff] %v708
      %739 = vst [vmem:[%s301 + $0x60] sm:$0xff] %v713
      %740 = vst [vmem:[%s301 + $0x68] sm:$0xff] %v716
      %741 = vst [vmem:[%s301 + $0x70] sm:$0xff] %v721
      %742 = vst [vmem:[%s301 + $0x78] sm:$0xff] %v724
      %v743 = vld [vmem:[%s307] sm:$0x1]
      %v744 = vadd.f32 %v665, %v668
      %v745 = vadd.f32 %v744, %v673
      %v746 = vadd.f32 %v745, %v676
      %v747 = vadd.f32 %v746, %v681
      %v748 = vadd.f32 %v747, %v684
      %v749 = vadd.f32 %v748, %v689
      %v750 = vadd.f32 %v749, %v692
      %v751 = vadd.f32 %v750, %v697
      %v752 = vadd.f32 %v751, %v700
      %v753 = vadd.f32 %v752, %v705
      %v754 = vadd.f32 %v753, %v708
      %v755 = vadd.f32 %v754, %v713
      %v756 = vadd.f32 %v755, %v716
      %v757 = vadd.f32 %v756, %v721
      %v758 = vadd.f32 %v757, %v724
      %v759 = vrot.slane %v758, 4
      %v760 = vadd.f32 %v758, %v759
      %v761 = vrot.slane %v760, 2
      %v762 = vadd.f32 %v760, %v761
      %v763 = vrot.slane %v762, 1
      %v764 = vadd.f32 %v762, %v763
      %v765 = vadd.f32 %v743, %v764
      %766 = vst [vmem:[%s307] sm:$0x1] %v765
      %v767 = vld [vmem:[%s310] sm:$0x1]
      %v768 = vmul.f32 %v665, %v665
      %v769 = vmul.f32 %v668, %v668
      %v770 = vmul.f32 %v673, %v673
      %v771 = vmul.f32 %v676, %v676
      %v772 = vmul.f32 %v681, %v681
      %v773 = vmul.f32 %v684, %v684
      %v774 = vmul.f32 %v689, %v689
      %v775 = vmul.f32 %v692, %v692
      %v776 = vmul.f32 %v697, %v697
      %v777 = vmul.f32 %v700, %v700
      %v778 = vmul.f32 %v705, %v705
      %v779 = vmul.f32 %v708, %v708
      %v780 = vmul.f32 %v713, %v713
      %v781 = vmul.f32 %v716, %v716
      %v782 = vmul.f32 %v721, %v721
      %v783 = vmul.f32 %v724, %v724
      %v784 = vadd.f32 %v768, %v769
      %v785 = vadd.f32 %v784, %v770
      %v786 = vadd.f32 %v785, %v771
      %v787 = vadd.f32 %v786, %v772
      %v788 = vadd.f32 %v787, %v773
      %v789 = vadd.f32 %v788, %v774
      %v790 = vadd.f32 %v789, %v775
      %v791 = vadd.f32 %v790, %v776
      %v792 = vadd.f32 %v791, %v777
      %v793 = vadd.f32 %v792, %v778
      %v794 = vadd.f32 %v793, %v779
      %v795 = vadd.f32 %v794, %v780
      %v796 = vadd.f32 %v795, %v781
      %v797 = vadd.f32 %v796, %v782
      %v798 = vadd.f32 %v797, %v783
      %v799 = vrot.slane %v798, 4
      %v800 = vadd.f32 %v798, %v799
      %v801 = vrot.slane %v800, 2
      %v802 = vadd.f32 %v800, %v801
      %v803 = vrot.slane %v802, 1
      %v804 = vadd.f32 %v802, %v803
      %v805 = vadd.f32 %v767, %v804
      %806 = vst [vmem:[%s310] sm:$0x1] %v805
      %s807 = smul.u32 %s22, 4
      %s808 = sadd.s32 %s807, %s23
      %s809 = smul.u32 16, %s808
      %p810 = scmp.lt.s32.totalorder %s809, 63
      %s811 = scalar_select %p810, %s809, 63
      %s812 = smul.addr %s811, 8
      %s813 = scalar_lea.vmem %s4, %s812
      %p814 = scmp.lt.s32.totalorder %s22, 0
      %s815 = scalar_select %p814, %s22, 0
      %s816 = scalar_lea.vmem %s5, %s815
      %p817 = scmp.lt.s32.totalorder %s22, 0
      %s818 = scalar_select %p817, %s22, 0
      %s819 = scalar_lea.vmem %s6, %s818
      // Predicated region
      $region41: #{projection_head.4} parent=35 // pred_check
        %p820 = pneg %p145
      $region42: #{projection_head.4} parent=35 // pred_check_branch
        %822 = sbr.rel (%p820) target = $region44
      $region43: #{projection_head.4} parent=35 // pred_region
        %s823 = smul.u32 %s22, 4
        %s824 = sadd.s32 %s823, %s23
        %s825 = smul.u32 16, %s824
      $region44: #{projection_head.4} parent=35 // pred_fallthru
        _
      // Predicated region
      $region45: #{projection_head.4} parent=35 // pred_check
        %p826 = pneg %p171
      $region46: #{projection_head.4} parent=35 // pred_check_branch
        %828 = sbr.rel (%p826) target = $region48
      $region47: #{projection_head.4} parent=35 // pred_region
        _
      $region48: #{projection_head.4} parent=35 // pred_fallthru
        _
      // Predicated region
      $region49: #{projection_head.4} parent=35 // pred_check
        %p829 = pneg %p197
      $region50: #{projection_head.4} parent=35 // pred_check_branch
        %831 = sbr.rel (%p829) target = $region52
      $region51: #{projection_head.4} parent=35 // pred_region
        _
      $region52: #{projection_head.4} parent=35 // pred_fallthru
        _
      // Predicated region
      $region53: #{projection_head.4} parent=35 // pred_check
        %p832 = pneg %p171
      $region54: #{projection_head.4} parent=35 // pred_check_branch
        %834 = sbr.rel (%p832) target = $region56
      $region55: #{projection_head.4} parent=35 // pred_region
        %p835 = scmp.lt.s32.totalorder %s22, 0
        %s836 = scalar_select %p835, %s22, 0
        %s837 = scalar_lea.vmem %s5, %s836
      $region56: #{projection_head.4} parent=35 // pred_fallthru
        _
      // Predicated region
      $region57: #{projection_head.4} parent=35 // pred_check
        %p838 = pneg %p197
      $region58: #{projection_head.4} parent=35 // pred_check_branch
        %840 = sbr.rel (%p838) target = $region60
      $region59: #{projection_head.4} parent=35 // pred_region
        %p841 = scmp.lt.s32.totalorder %s22, 0
        %s842 = scalar_select %p841, %s22, 0
        %s843 = scalar_lea.vmem %s6, %s842
      $region60: #{projection_head.4} parent=35 // pred_fallthru
        _
    $region36: #{projection_head.4} parent=5 // pred_fallthru
      _
    %p844 = scmp.le.s32.totalorder 2, %s13
    // Predicated region
    $region61: #{projection_head.4} parent=5 // pred_check
      %p845 = pneg %p844
    $region62: #{projection_head.4} parent=5 // pred_check_branch
      %847 = sbr.rel (%p845) target = $region64
    $region63: #{projection_head.4} parent=5 // pred_region
      %s848 = ssub.s32 %s13, 2
      // Predicated region
      $region65: #{projection_head.4} parent=63 // pred_check
        %p849 = pneg %p151
      $region66: #{projection_head.4} parent=63 // pred_check_branch
        %851 = sbr.rel (%p849) target = $region68
      $region67: #{projection_head.4} parent=63 // pred_region
        %s852 = smul.u32 %s24, 4
        %s853 = sadd.s32 %s852, %s25
        %s854 = smul.u32 16, %s853
        %p855 = scmp.lt.s32.totalorder %s854, 63
        %s856 = scalar_select %p855, %s854, 63
        %s857 = smul.addr %s856, 8
        %s858 = scalar_lea.vmem %s4, %s857
      $region68: #{projection_head.4} parent=63 // pred_fallthru
        _
    $region64: #{projection_head.4} parent=5 // pred_fallthru
      _
  $region6: #{projection_head.4} parent=0 // loop_footer
    %s17 = sadd.s32 1, %s13
  $region7: #{projection_head.4} parent=0 // loop_footer_branch
    %12 = sbr.rel target = $region3
  $region8: #{projection_head.4} parent=0 // loop_exit
    _

// kernel: projection_head.3
$region0: #{projection_head.3}
  #allocation0 [shape = 'u32[]', space=smem, size = 0x4, offset = 0x4, fixed_abs, tag = 'smem constant byte address 0x4 - core index']
  #allocation1 [shape = 'u32[144,128]{1,0:T(1,128)}', space=vmem, size = 0x12000, scoped, tag = 'internal scratch']
  %s0 = inlined_call_operand.vmem [shape: bf16[512,128], index: 0, kind: input, shape index: {}]
  %s1 = inlined_call_operand.vmem [shape: bf16[128,256], index: 1, kind: input, shape index: {}]
  %s2 = inlined_call_operand.vmem [shape: bf16[512,256], index: 2, kind: output, shape index: {0}]
  %s3 = inlined_call_operand.vmem [shape: f32[1,256], index: 3, kind: output, shape index: {1}]
  %s4 = inlined_call_operand.vmem [shape: f32[1,256], index: 4, kind: output, shape index: {2}]
  %5 = xla_tuple %s2, %s3, %s4
  %s6 = sld [smem:[#allocation0]]
  $region61: #{projection_head.3} parent=0
    _
  %s8 = ssub.s32 1, %s6
  %s9 = scalar_select 0, %s8, %s6
  loop: start=0, step=1, limit=6
  $region2: #{projection_head.3} parent=0 // loop_pre_header
    _
  $region3: #{projection_head.3} parent=0 // loop_header
    %s11 = sphi 0, %s15
    %p12 = scmp.ge.s32.totalorder %s11, 6
    %s18 = sphi 0, %s30
    %s19 = sphi 0, %s26
    %s20 = sphi 0, %s18
    %s21 = sphi 0, %s19
    %s22 = sphi 0, %s20
    %s23 = sphi 0, %s21
    %s37 = sphi 0, %s39
    %s40 = sphi 0, %s37
    %s41 = sphi 0, %s40
    %s57 = sphi 0, %s41
    %s61 = sphi 0, %s61
    %s63 = sphi 0, %s61
    %s64 = sphi 0, %s63
    %s78 = sphi 0, %s64
    %s88 = sphi 0, %s90
    %s91 = sphi 0, %s88
    %s92 = sphi 0, %s91
    %s108 = sphi 0, %s92
    %s114 = sphi 0, %s116
    %s117 = sphi 0, %s114
    %s118 = sphi 0, %s117
    %s134 = sphi 0, %s118
    %s140 = sphi 0, %s142
    %s143 = sphi 0, %s140
    %s144 = sphi 0, %s143
    %s160 = sphi 0, %s144
  $region4: #{projection_head.3} parent=0 // loop_header_branch
    %14 = sbr.rel (%p12) target = $region8
  $region5: #{projection_head.3} parent=0 // loop_body
    %s16 = ssub.s32 %s11, 1
    %s17 = ssub.s32 %s11, 2
    %s24 = sadd.s32 1, %s19
    %p25 = scmp.ge.s32.totalorder %s24, 4
    %s26 = scalar_select %p25, 0, %s24
    %s27 = sadd.s32 1, %s18
    %s28 = scalar_select %p25, %s27, %s18
    %p29 = scmp.ge.s32.totalorder %s28, 1
    %s30 = scalar_select %p29, 0, %s28
    %s31 = smul.u32 %s18, 4
    %s32 = sadd.s32 %s31, %s19
    %s33 = smul.u32 %s30, 4
    %s34 = sadd.s32 %s33, %s26
    %s35 = ssub.s32 %s32, %s34
    %p36 = scmp.eq.s32.totalorder %s35, 0
    %s38 = sadd.s32 %s37, 1
    %s39 = scalar_select %p36, %s37, %s38
    %p42 = pneg %p36
    %p43 = scmp.eq.s32.totalorder %s11, 3
    %p44 = por %p42, %p43
    %p45 = scmp.ne.s32.totalorder %s37, %s40
    %p46 = scmp.eq.s32.totalorder %s11, 0
    %p47 = por %p45, %p46
    %p48 = scmp.ne.s32.totalorder %s37, %s40
    %p49 = scmp.eq.s32.totalorder %s16, 3
    %p50 = por %p48, %p49
    %p51 = scmp.ne.s32.totalorder %s40, %s41
    %p52 = scmp.eq.s32.totalorder %s16, 0
    %p53 = por %p51, %p52
    %p54 = scmp.ne.s32.totalorder %s40, %s41
    %p55 = scmp.eq.s32.totalorder %s17, 3
    %p56 = por %p54, %p55
    %p58 = scmp.ne.s32.totalorder %s41, %s57
    %p59 = scmp.eq.s32.totalorder %s17, 0
    %p60 = por %p58, %p59
    %s62 = sadd.s32 %s61, 1
    %p65 = scmp.eq.s32.totalorder %s11, 3
    %p66 = scmp.ne.s32.totalorder %s61, %s63
    %p67 = scmp.eq.s32.totalorder %s11, 0
    %p68 = por %p66, %p67
    %p69 = scmp.ne.s32.totalorder %s61, %s63
    %p70 = scmp.eq.s32.totalorder %s16, 3
    %p71 = por %p69, %p70
    %p72 = scmp.ne.s32.totalorder %s63, %s64
    %p73 = scmp.eq.s32.totalorder %s16, 0
    %p74 = por %p72, %p73
    %p75 = scmp.ne.s32.totalorder %s63, %s64
    %p76 = scmp.eq.s32.totalorder %s17, 3
    %p77 = por %p75, %p76
    %p79 = scmp.ne.s32.totalorder %s64, %s78
    %p80 = scmp.eq.s32.totalorder %s17, 0
    %p81 = por %p79, %p80
    %s82 = smul.u32 %s18, 4
    %s83 = sadd.s32 %s82, %s19
    %s84 = smul.u32 %s30, 4
    %s85 = sadd.s32 %s84, %s26
    %s86 = ssub.s32 %s83, %s85
    %p87 = scmp.eq.s32.totalorder %s86, 0
    %s89 = sadd.s32 %s88, 1
    %s90 = scalar_select %p87, %s88, %s89
    %p93 = pneg %p87
    %p94 = scmp.eq.s32.totalorder %s11, 3
    %p95 = por %p93, %p94
    %p96 = scmp.ne.s32.totalorder %s88, %s91
    %p97 = scmp.eq.s32.totalorder %s11, 0
    %p98 = por %p96, %p97
    %p99 = scmp.ne.s32.totalorder %s88, %s91
    %p100 = scmp.eq.s32.totalorder %s16, 3
    %p101 = por %p99, %p100
    %p102 = scmp.ne.s32.totalorder %s91, %s92
    %p103 = scmp.eq.s32.totalorder %s16, 0
    %p104 = por %p102, %p103
    %p105 = scmp.ne.s32.totalorder %s91, %s92
    %p106 = scmp.eq.s32.totalorder %s17, 3
    %p107 = por %p105, %p106
    %p109 = scmp.ne.s32.totalorder %s92, %s108
    %p110 = scmp.eq.s32.totalorder %s17, 0
    %p111 = por %p109, %p110
    %s112 = ssub.s32 %s18, %s30
    %p113 = scmp.eq.s32.totalorder %s112, 0
    %s115 = sadd.s32 %s114, 1
    %s116 = scalar_select %p113, %s114, %s115
    %p119 = pneg %p113
    %p120 = scmp.eq.s32.totalorder %s11, 3
    %p121 = por %p119, %p120
    %p122 = scmp.ne.s32.totalorder %s114, %s117
    %p123 = scmp.eq.s32.totalorder %s11, 0
    %p124 = por %p122, %p123
    %p125 = scmp.ne.s32.totalorder %s114, %s117
    %p126 = scmp.eq.s32.totalorder %s16, 3
    %p127 = por %p125, %p126
    %p128 = scmp.ne.s32.totalorder %s117, %s118
    %p129 = scmp.eq.s32.totalorder %s16, 0
    %p130 = por %p128, %p129
    %p131 = scmp.ne.s32.totalorder %s117, %s118
    %p132 = scmp.eq.s32.totalorder %s17, 3
    %p133 = por %p131, %p132
    %p135 = scmp.ne.s32.totalorder %s118, %s134
    %p136 = scmp.eq.s32.totalorder %s17, 0
    %p137 = por %p135, %p136
    %s138 = ssub.s32 %s18, %s30
    %p139 = scmp.eq.s32.totalorder %s138, 0
    %s141 = sadd.s32 %s140, 1
    %s142 = scalar_select %p139, %s140, %s141
    %p145 = pneg %p139
    %p146 = scmp.eq.s32.totalorder %s11, 3
    %p147 = por %p145, %p146
    %p148 = scmp.ne.s32.totalorder %s140, %s143
    %p149 = scmp.eq.s32.totalorder %s11, 0
    %p150 = por %p148, %p149
    %p151 = scmp.ne.s32.totalorder %s140, %s143
    %p152 = scmp.eq.s32.totalorder %s16, 3
    %p153 = por %p151, %p152
    %p154 = scmp.ne.s32.totalorder %s143, %s144
    %p155 = scmp.eq.s32.totalorder %s16, 0
    %p156 = por %p154, %p155
    %p157 = scmp.ne.s32.totalorder %s143, %s144
    %p158 = scmp.eq.s32.totalorder %s17, 3
    %p159 = por %p157, %p158
    %p161 = scmp.ne.s32.totalorder %s144, %s160
    %p162 = scmp.eq.s32.totalorder %s17, 0
    %p163 = por %p161, %p162
    %p164 = scmp.le.s32.totalorder 1, %s11
    %p165 = scmp.lt.s32.totalorder %s11, 5
    %p166 = pnand %p164, %p165
    %p167 = pneg %p166
    // Predicated region
    $region9: #{projection_head.3} parent=5 // pred_check
      _
    $region10: #{projection_head.3} parent=5 // pred_check_branch
      %169 = sbr.rel (%p166) target = $region12
    $region11: #{projection_head.3} parent=5 // pred_region
      %s170 = ssub.s32 %s11, 1
      // Predicated region
      $region13: #{projection_head.3} parent=11 // pred_check
        %p171 = pneg %p74
      $region14: #{projection_head.3} parent=11 // pred_check_branch
        %173 = sbr.rel (%p171) target = $region16
      $region15: #{projection_head.3} parent=11 // pred_region
        _
      $region16: #{projection_head.3} parent=11 // pred_fallthru
        _
    $region12: #{projection_head.3} parent=5 // pred_fallthru
      _
    %p174 = scmp.lt.s32.totalorder %s11, 4
    // Predicated region
    $region17: #{projection_head.3} parent=5 // pred_check
      %p175 = pneg %p174
    $region18: #{projection_head.3} parent=5 // pred_check_branch
      %177 = sbr.rel (%p175) target = $region20
    $region19: #{projection_head.3} parent=5 // pred_region
      // Predicated region
      $region21: #{projection_head.3} parent=19 // pred_check
        %p178 = pneg %p47
      $region22: #{projection_head.3} parent=19 // pred_check_branch
        %180 = sbr.rel (%p178) target = $region24
      $region23: #{projection_head.3} parent=19 // pred_region
        %s181 = smul.u32 %s18, 4
        %s182 = sadd.s32 %s181, %s19
        %s183 = smul.u32 16, %s182
        %p184 = scmp.lt.s32.totalorder %s183, 63
        %s185 = scalar_select %p184, %s183, 63
        %s186 = smul.addr %s185, 4
        %s187 = scalar_lea.vmem %s0, %s186
        %s188 = smul.u32 %s18, 4
        %s189 = sadd.s32 %s188, %s19
        %s190 = smul.u32 16, %s189
      $region24: #{projection_head.3} parent=19 // pred_fallthru
        _
    $region20: #{projection_head.3} parent=5 // pred_fallthru
      _
    %p191 = scmp.le.s32.totalorder 1, %s11
    %p192 = scmp.lt.s32.totalorder %s11, 5
    %p193 = pnand %p191, %p192
    %p194 = pneg %p193
    // Predicated region
    $region25: #{projection_head.3} parent=5 // pred_check
      _
    $region26: #{projection_head.3} parent=5 // pred_check_branch
      %196 = sbr.rel (%p193) target = $region28
    $region27: #{projection_head.3} parent=5 // pred_region
      %s197 = ssub.s32 %s11, 1
      %s198 = smul.u32 %s20, 4
      %s199 = sadd.s32 %s198, %s21
      %s200 = smul.u32 16, %s199
      %p201 = scmp.lt.s32.totalorder %s200, 63
      %s202 = scalar_select %p201, %s200, 63
      %s203 = smul.addr %s202, 4
      %s204 = scalar_lea.vmem %s0, %s203
      %p205 = pneg %p53
      %p206 = pneg %p50
      %p207 = pneg %p74
      %p208 = pneg %p71
      %p209 = pneg %p104
      %p210 = pneg %p101
      %s211 = smul.u32 %s20, 4
      %s212 = sadd.s32 %s211, %s21
      %s213 = smul.u32 16, %s212
      %p214 = scmp.lt.s32.totalorder %s213, 63
      %s215 = scalar_select %p214, %s213, 63
      %s216 = smul.addr %s215, 2
      %s217 = smul.addr %s216, 4
      %s218 = scalar_lea.vmem %s2, %s217
      %p219 = pneg %p130
      %p220 = pneg %p127
      %p221 = scmp.lt.s32.totalorder %s20, 0
      %s222 = scalar_select %p221, %s20, 0
      %s223 = smul.addr %s222, 2
      %s224 = scalar_lea.vmem %s3, %s223
      %p225 = pneg %p156
      %p226 = pneg %p153
      %p227 = scmp.lt.s32.totalorder %s20, 0
      %s228 = scalar_select %p227, %s20, 0
      %s229 = smul.addr %s228, 2
      %s230 = scalar_lea.vmem %s4, %s229
      %s231 = smul.u32 %s20, 4
      %s232 = sadd.s32 %s231, %s21
      %s233 = smul.u32 16, %s232
      %p234 = scmp.lt.s32.totalorder %s233, 63
      %s235 = scalar_select %p234, %s233, 63
      %s236 = smul.addr %s235, 4
      %s237 = scalar_lea.vmem %s0, %s236
      %s238 = smul.u32 %s20, 4
      %s239 = sadd.s32 %s238, %s21
      %s240 = smul.u32 16, %s239
      %s241 = smul.u32 %s20, 4
      %s242 = sadd.s32 %s241, %s21
      %s243 = smul.u32 16, %s242
      %p244 = scmp.lt.s32.totalorder %s243, 63
      %s245 = scalar_select %p244, %s243, 63
      %s246 = smul.addr %s245, 2
      %s247 = smul.addr %s246, 4
      %s248 = scalar_lea.vmem %s2, %s247
      %s249 = smul.u32 %s20, 4
      %s250 = sadd.s32 %s249, %s21
      %s251 = smul.u32 16, %s250
      %p252 = scmp.lt.s32.totalorder %s20, 0
      %s253 = scalar_select %p252, %s20, 0
      %s254 = smul.addr %s253, 2
      %s255 = scalar_lea.vmem %s3, %s254
      %p256 = scmp.lt.s32.totalorder %s20, 0
      %s257 = scalar_select %p256, %s20, 0
      %s258 = smul.addr %s257, 2
      %s259 = scalar_lea.vmem %s4, %s258
      %p261 = scmp.eq.s32.totalorder %s21, 0
      // Predicated region
      $region29: #{projection_head.3} parent=27 // pred_check
        %p262 = pneg %p261
      $region30: #{projection_head.3} parent=27 // pred_check_branch
        %264 = sbr.rel (%p262) target = $region32
      $region31: #{projection_head.3} parent=27 // pred_region
        %v265 = vlaneseq
        %vm266 = vcmp.ge.s32.totalorder %v265, 0
        %vm267 = vcmp.lt.s32.totalorder %v265, 256
        %vm268 = vmand %vm266, %vm267
        %269 = vst.msk [vmem:[%s255] sm:$0x3] %vm268, 0.0
        %270 = vst.msk [vmem:[%s259] sm:$0x3] %vm268, 0.0
      $region32: #{projection_head.3} parent=27 // pred_fallthru
        _
      %v271 = vld [vmem:[%s237] sm:$0xf]
      %v272 = vld [vmem:[%s237 + $0x4] sm:$0xf]
      %v273 = vld [vmem:[%s237 + $0x8] sm:$0xf]
      %v274 = vld [vmem:[%s237 + $0xc] sm:$0xf]
      %v275 = vld [vmem:[%s237 + $0x10] sm:$0xf]
      %v276 = vld [vmem:[%s237 + $0x14] sm:$0xf]
      %v277 = vld [vmem:[%s237 + $0x18] sm:$0xf]
      %v278 = vld [vmem:[%s237 + $0x1c] sm:$0xf]
      %v279 = vld [vmem:[%s237 + $0x20] sm:$0xf]
      %v280 = vld [vmem:[%s237 + $0x24] sm:$0xf]
      %v281 = vld [vmem:[%s237 + $0x28] sm:$0xf]
      %v282 = vld [vmem:[%s237 + $0x2c] sm:$0xf]
      %v283 = vld [vmem:[%s237 + $0x30] sm:$0xf]
      %v284 = vld [vmem:[%s237 + $0x34] sm:$0xf]
      %v285 = vld [vmem:[%s237 + $0x38] sm:$0xf]
      %v286 = vld [vmem:[%s237 + $0x3c] sm:$0xf]
      %v287 = vld [vmem:[%s1] sm:$0xff]
      %v288 = vld [vmem:[%s1 + $0x8] sm:$0xff]
      %v289 = vld [vmem:[%s1 + $0x10] sm:$0xff]
      %v290 = vld [vmem:[%s1 + $0x18] sm:$0xff]
      %v291 = vld [vmem:[%s1 + $0x20] sm:$0xff]
      %v292 = vld [vmem:[%s1 + $0x28] sm:$0xff]
      %v293 = vld [vmem:[%s1 + $0x30] sm:$0xff]
      %v294 = vld [vmem:[%s1 + $0x38] sm:$0xff]
      %v295 = vld [vmem:[%s1 + $0x40] sm:$0xff]
      %v296 = vld [vmem:[%s1 + $0x48] sm:$0xff]
      %v297 = vld [vmem:[%s1 + $0x50] sm:$0xff]
      %v298 = vld [vmem:[%s1 + $0x58] sm:$0xff]
      %v299 = vld [vmem:[%s1 + $0x60] sm:$0xff]
      %v300 = vld [vmem:[%s1 + $0x68] sm:$0xff]
      %v301 = vld [vmem:[%s1 + $0x70] sm:$0xff]
      %v302 = vld [vmem:[%s1 + $0x78] sm:$0xff]
      %v319 = vunpack.c.l.b16 %v271
      %v320 = vunpack.c.l.b16 %v272
      %v321 = vunpack.c.l.b16 %v273
      %v322 = vunpack.c.l.b16 %v274
      %v323 = vunpack.c.l.b16 %v275
      %v324 = vunpack.c.l.b16 %v276
      %v325 = vunpack.c.l.b16 %v277
      %v326 = vunpack.c.l.b16 %v278
      %v327 = vunpack.c.l.b16 %v279
      %v328 = vunpack.c.l.b16 %v280
      %v329 = vunpack.c.l.b16 %v281
      %v330 = vunpack.c.l.b16 %v282
      %v331 = vunpack.c.l.b16 %v283
      %v332 = vunpack.c.l.b16 %v284
      %v333 = vunpack.c.l.b16 %v285
      %v334 = vunpack.c.l.b16 %v286
      %v335 = vpack.c.b16 %v320, %v319
      %v336 = vpack.c.b16 %v322, %v321
      %v337 = vpack.c.b16 %v324, %v323
      %v338 = vpack.c.b16 %v326, %v325
      %v339 = vpack.c.b16 %v328, %v327
      %v340 = vpack.c.b16 %v330, %v329
      %v341 = vpack.c.b16 %v332, %v331
      %v342 = vpack.c.b16 %v334, %v333
      %v367 = vunpack.c.l.b16 %v287
      %v368 = vunpack.c.h.b16 %v287
      %v369 = vunpack.c.l.b16 %v288
      %v370 = vunpack.c.h.b16 %v288
      %v371 = vunpack.c.l.b16 %v289
      %v372 = vunpack.c.h.b16 %v289
      %v373 = vunpack.c.l.b16 %v290
      %v374 = vunpack.c.h.b16 %v290
      %v375 = vunpack.c.l.b16 %v291
      %v376 = vunpack.c.h.b16 %v291
      %v377 = vunpack.c.l.b16 %v292
      %v378 = vunpack.c.h.b16 %v292
      %v379 = vunpack.c.l.b16 %v293
      %v380 = vunpack.c.h.b16 %v293
      %v381 = vunpack.c.l.b16 %v294
      %v382 = vunpack.c.h.b16 %v294
      %v383 = vunpack.c.l.b16 %v295
      %v384 = vunpack.c.h.b16 %v295
      %v385 = vunpack.c.l.b16 %v296
      %v386 = vunpack.c.h.b16 %v296
      %v387 = vunpack.c.l.b16 %v297
      %v388 = vunpack.c.h.b16 %v297
      %v389 = vunpack.c.l.b16 %v298
      %v390 = vunpack.c.h.b16 %v298
      %v391 = vunpack.c.l.b16 %v299
      %v392 = vunpack.c.h.b16 %v299
      %v393 = vunpack.c.l.b16 %v300
      %v394 = vunpack.c.h.b16 %v300
      %v395 = vunpack.c.l.b16 %v301
      %v396 = vunpack.c.h.b16 %v301
      %v397 = vunpack.c.l.b16 %v302
      %v398 = vunpack.c.h.b16 %v302
      %v399 = vpack.c.b16 %v369, %v367
      %v400 = vpack.c.b16 %v370, %v368
      %v401 = vpack.c.b16 %v373, %v371
      %v402 = vpack.c.b16 %v374, %v372
      %v403 = vpack.c.b16 %v377, %v375
      %v404 = vpack.c.b16 %v378, %v376
      %v405 = vpack.c.b16 %v381, %v379
      %v406 = vpack.c.b16 %v382, %v380
      %v407 = vpack.c.b16 %v385, %v383
      %v408 = vpack.c.b16 %v386, %v384
      %v409 = vpack.c.b16 %v389, %v387
      %v410 = vpack.c.b16 %v390, %v388
      %v411 = vpack.c.b16 %v393, %v391
      %v412 = vpack.c.b16 %v394, %v392
      %v413 = vpack.c.b16 %v397, %v395
      %v414 = vpack.c.b16 %v398, %v396
      %431 = vmatprep.subr.bf16.mxu0 %v414
      %432 = vmatpush1.bf16.msra.mxu0 %v413
      %433 = vmatprep.subr.bf16.mxu0 %v412
      %434 = vmatpush1.bf16.msra.mxu0 %v411
      %435 = vmatprep.subr.bf16.mxu0 %v410
      %436 = vmatpush1.bf16.msra.mxu0 %v409
      %437 = vmatprep.subr.bf16.mxu0 %v408
      %438 = vmatpush1.bf16.msra.mxu0 %v407
      %439 = vmatprep.subr.bf16.mxu0 %v406
      %440 = vmatpush1.bf16.msra.mxu0 %v405
      %441 = vmatprep.subr.bf16.mxu0 %v404
      %442 = vmatpush1.bf16.msra.mxu0 %v403
      %443 = vmatprep.subr.bf16.mxu0 %v402
      %444 = vmatpush1.bf16.msra.mxu0 %v401
      %445 = vmatprep.subr.bf16.mxu0 %v400
      %446 = vmatpush1.bf16.msra.mxu0 %v399
      %447 = vmatprep.subr.bf16.mxu0 0
      %448 = vmatpush2.bf16.msra.mxu0 0
      %449 = vmatprep.subr.bf16.mxu0 0
      %450 = vmatpush2.bf16.msra.mxu0 0
      %451 = vmatprep.subr.bf16.mxu0 0
      %452 = vmatpush2.bf16.msra.mxu0 0
      %453 = vmatprep.subr.bf16.mxu0 0
      %454 = vmatpush2.bf16.msra.mxu0 0
      %455 = vmatprep.subr.bf16.mxu0 0
      %456 = vmatpush2.bf16.msra.mxu0 0
      %457 = vmatprep.subr.bf16.mxu0 0
      %458 = vmatpush2.bf16.msra.mxu0 0
      %459 = vmatprep.subr.bf16.mxu0 0
      %460 = vmatpush2.bf16.msra.mxu0 0
      %461 = vmatprep.subr.bf16.mxu0 0
      %462 = vmatpush2.bf16.msra.mxu0 0
      %463 = vmatprep.mubr.bf16.mxu0 0
      %464 = vmatmul.mubr.bf16.gmra.mxu0 %v335
      %v465 = vpop.f32.mrf.mxu0
      %v466 = vadd.f32 0.0, %v465
      %v467 = vpop.f32.mrf.mxu0
      %v468 = vadd.f32 0.0, %v467
      %v469 = vpop.f32.mrf.mxu0
      %v470 = vadd.f32 0.0, %v469
      %v471 = vpop.f32.mrf.mxu0
      %v472 = vadd.f32 0.0, %v471
      %473 = vmatprep.mubr.bf16.mxu0 0
      %474 = vmatmul.mubr.bf16.gmra.mxu0 %v336
      %v475 = vpop.f32.mrf.mxu0
      %v476 = vadd.f32 0.0, %v475
      %v477 = vpop.f32.mrf.mxu0
      %v478 = vadd.f32 0.0, %v477
      %v479 = vpop.f32.mrf.mxu0
      %v480 = vadd.f32 0.0, %v479
      %v481 = vpop.f32.mrf.mxu0
      %v482 = vadd.f32 0.0, %v481
      %483 = vmatprep.mubr.bf16.mxu0 0
      %484 = vmatmul.mubr.bf16.gmra.mxu0 %v337
      %v485 = vpop.f32.mrf.mxu0
      %v486 = vadd.f32 0.0, %v485
      %v487 = vpop.f32.mrf.mxu0
      %v488 = vadd.f32 0.0, %v487
      %v489 = vpop.f32.mrf.mxu0
      %v490 = vadd.f32 0.0, %v489
      %v491 = vpop.f32.mrf.mxu0
      %v492 = vadd.f32 0.0, %v491
      %493 = vmatprep.mubr.bf16.mxu0 0
      %494 = vmatmul.mubr.bf16.gmra.mxu0 %v338
      %v495 = vpop.f32.mrf.mxu0
      %v496 = vadd.f32 0.0, %v495
      %v497 = vpop.f32.mrf.mxu0
      %v498 = vadd.f32 0.0, %v497
      %v499 = vpop.f32.mrf.mxu0
      %v500 = vadd.f32 0.0, %v499
      %v501 = vpop.f32.mrf.mxu0
      %v502 = vadd.f32 0.0, %v501
      %503 = vmatprep.mubr.bf16.mxu0 0
      %504 = vmatmul.mubr.bf16.gmra.mxu0 %v339
      %v505 = vpop.f32.mrf.mxu0
      %v506 = vadd.f32 0.0, %v505
      %v507 = vpop.f32.mrf.mxu0
      %v508 = vadd.f32 0.0, %v507
      %v509 = vpop.f32.mrf.mxu0
      %v510 = vadd.f32 0.0, %v509
      %v511 = vpop.f32.mrf.mxu0
      %v512 = vadd.f32 0.0, %v511
      %513 = vmatprep.mubr.bf16.mxu0 0
      %514 = vmatmul.mubr.bf16.gmra.mxu0 %v340
      %v515 = vpop.f32.mrf.mxu0
      %v516 = vadd.f32 0.0, %v515
      %v517 = vpop.f32.mrf.mxu0
      %v518 = vadd.f32 0.0, %v517
      %v519 = vpop.f32.mrf.mxu0
      %v520 = vadd.f32 0.0, %v519
      %v521 = vpop.f32.mrf.mxu0
      %v522 = vadd.f32 0.0, %v521
      %523 = vmatprep.mubr.bf16.mxu0 0
      %524 = vmatmul.mubr.bf16.gmra.mxu0 %v341
      %v525 = vpop.f32.mrf.mxu0
      %v526 = vadd.f32 0.0, %v525
      %v527 = vpop.f32.mrf.mxu0
      %v528 = vadd.f32 0.0, %v527
      %v529 = vpop.f32.mrf.mxu0
      %v530 = vadd.f32 0.0, %v529
      %v531 = vpop.f32.mrf.mxu0
      %v532 = vadd.f32 0.0, %v531
      %533 = vmatprep.mubr.bf16.mxu0 0
      %534 = vmatmul.mubr.bf16.gmra.mxu0 %v342
      %v535 = vpop.f32.mrf.mxu0
      %v536 = vadd.f32 0.0, %v535
      %v537 = vpop.f32.mrf.mxu0
      %v538 = vadd.f32 0.0, %v537
      %v539 = vpop.f32.mrf.mxu0
      %v540 = vadd.f32 0.0, %v539
      %v541 = vpop.f32.mrf.mxu0
      %v542 = vadd.f32 0.0, %v541
      %543 = vdwg.mxu0
      %v544 = vpack.c.bf16 %v470, %v466
      %v545 = vpack.c.bf16 %v472, %v468
      %v546 = vpack.c.bf16 %v480, %v476
      %v547 = vpack.c.bf16 %v482, %v478
      %v548 = vpack.c.bf16 %v490, %v486
      %v549 = vpack.c.bf16 %v492, %v488
      %v550 = vpack.c.bf16 %v500, %v496
      %v551 = vpack.c.bf16 %v502, %v498
      %v552 = vpack.c.bf16 %v510, %v506
      %v553 = vpack.c.bf16 %v512, %v508
      %v554 = vpack.c.bf16 %v520, %v516
      %v555 = vpack.c.bf16 %v522, %v518
      %v556 = vpack.c.bf16 %v530, %v526
      %v557 = vpack.c.bf16 %v532, %v528
      %v558 = vpack.c.bf16 %v540, %v536
      %v559 = vpack.c.bf16 %v542, %v538
      %v576 = vunpack.c.l.b16 %v544
      %v577 = vunpack.c.l.b16 %v545
      %v578 = vunpack.c.h.b16 %v544
      %v579 = vunpack.c.h.b16 %v545
      %v580 = vunpack.c.l.b16 %v546
      %v581 = vunpack.c.l.b16 %v547
      %v582 = vunpack.c.h.b16 %v546
      %v583 = vunpack.c.h.b16 %v547
      %v584 = vunpack.c.l.b16 %v548
      %v585 = vunpack.c.l.b16 %v549
      %v586 = vunpack.c.h.b16 %v548
      %v587 = vunpack.c.h.b16 %v549
      %v588 = vunpack.c.l.b16 %v550
      %v589 = vunpack.c.l.b16 %v551
      %v590 = vunpack.c.h.b16 %v550
      %v591 = vunpack.c.h.b16 %v551
      %v592 = vunpack.c.l.b16 %v552
      %v593 = vunpack.c.l.b16 %v553
      %v594 = vunpack.c.h.b16 %v552
      %v595 = vunpack.c.h.b16 %v553
      %v596 = vunpack.c.l.b16 %v554
      %v597 = vunpack.c.l.b16 %v555
      %v598 = vunpack.c.h.b16 %v554
      %v599 = vunpack.c.h.b16 %v555
      %v600 = vunpack.c.l.b16 %v556
      %v601 = vunpack.c.l.b16 %v557
      %v602 = vunpack.c.h.b16 %v556
      %v603 = vunpack.c.h.b16 %v557
      %v604 = vunpack.c.l.b16 %v558
      %v605 = vunpack.c.l.b16 %v559
      %v606 = vunpack.c.h.b16 %v558
      %v607 = vunpack.c.h.b16 %v559
      %v608 = vpack.c.b16 %v577, %v576
      %v609 = vpack.c.b16 %v579, %v578
      %v610 = vpack.c.b16 %v581, %v580
      %v611 = vpack.c.b16 %v583, %v582
      %v612 = vpack.c.b16 %v585, %v584
      %v613 = vpack.c.b16 %v587, %v586
      %v614 = vpack.c.b16 %v589, %v588
      %v615 = vpack.c.b16 %v591, %v590
      %v616 = vpack.c.b16 %v593, %v592
      %v617 = vpack.c.b16 %v595, %v594
      %v618 = vpack.c.b16 %v597, %v596
      %v619 = vpack.c.b16 %v599, %v598
      %v620 = vpack.c.b16 %v601, %v600
      %v621 = vpack.c.b16 %v603, %v602
      %v622 = vpack.c.b16 %v605, %v604
      %v623 = vpack.c.b16 %v607, %v606
      %640 = vst [vmem:[%s248] sm:$0xff] %v608
      %641 = vst [vmem:[%s248 + $0x8] sm:$0xff] %v609
      %642 = vst [vmem:[%s248 + $0x10] sm:$0xff] %v610
      %643 = vst [vmem:[%s248 + $0x18] sm:$0xff] %v611
      %644 = vst [vmem:[%s248 + $0x20] sm:$0xff] %v612
      %645 = vst [vmem:[%s248 + $0x28] sm:$0xff] %v613
      %646 = vst [vmem:[%s248 + $0x30] sm:$0xff] %v614
      %647 = vst [vmem:[%s248 + $0x38] sm:$0xff] %v615
      %648 = vst [vmem:[%s248 + $0x40] sm:$0xff] %v616
      %649 = vst [vmem:[%s248 + $0x48] sm:$0xff] %v617
      %650 = vst [vmem:[%s248 + $0x50] sm:$0xff] %v618
      %651 = vst [vmem:[%s248 + $0x58] sm:$0xff] %v619
      %652 = vst [vmem:[%s248 + $0x60] sm:$0xff] %v620
      %653 = vst [vmem:[%s248 + $0x68] sm:$0xff] %v621
      %654 = vst [vmem:[%s248 + $0x70] sm:$0xff] %v622
      %655 = vst [vmem:[%s248 + $0x78] sm:$0xff] %v623
      %v656 = vld [vmem:[%s255] sm:$0x3]
      %v657 = vadd.f32 %v466, %v470
      %v658 = vadd.f32 %v657, %v476
      %v659 = vadd.f32 %v658, %v480
      %v660 = vadd.f32 %v659, %v486
      %v661 = vadd.f32 %v660, %v490
      %v662 = vadd.f32 %v661, %v496
      %v663 = vadd.f32 %v662, %v500
      %v664 = vadd.f32 %v663, %v506
      %v665 = vadd.f32 %v664, %v510
      %v666 = vadd.f32 %v665, %v516
      %v667 = vadd.f32 %v666, %v520
      %v668 = vadd.f32 %v667, %v526
      %v669 = vadd.f32 %v668, %v530
      %v670 = vadd.f32 %v669, %v536
      %v671 = vadd.f32 %v670, %v540
      %v672 = vrot.slane %v671, 4
      %v673 = vadd.f32 %v671, %v672
      %v674 = vrot.slane %v673, 2
      %v675 = vadd.f32 %v673, %v674
      %v676 = vrot.slane %v675, 1
      %v677 = vadd.f32 %v675, %v676
      %v678 = vadd.f32 %v468, %v472
      %v679 = vadd.f32 %v678, %v478
      %v680 = vadd.f32 %v679, %v482
      %v681 = vadd.f32 %v680, %v488
      %v682 = vadd.f32 %v681, %v492
      %v683 = vadd.f32 %v682, %v498
      %v684 = vadd.f32 %v683, %v502
      %v685 = vadd.f32 %v684, %v508
      %v686 = vadd.f32 %v685, %v512
      %v687 = vadd.f32 %v686, %v518
      %v688 = vadd.f32 %v687, %v522
      %v689 = vadd.f32 %v688, %v528
      %v690 = vadd.f32 %v689, %v532
      %v691 = vadd.f32 %v690, %v538
      %v692 = vadd.f32 %v691, %v542
      %v693 = vrot.slane %v692, 4
      %v694 = vadd.f32 %v692, %v693
      %v695 = vrot.slane %v694, 2
      %v696 = vadd.f32 %v694, %v695
      %v697 = vrot.slane %v696, 1
      %v698 = vadd.f32 %v696, %v697
      %v701 = vcombine.low %v677, %v698
      %v703 = vunpack.c.l.s4 1966171168
      %v704 = vunpack.c.0.s8 %v703
      %v705 = vlaneseq
      %v706 = vshrl.u32 %v705, 7
      %v707 = vsub.s32 %v704, %v706
      %v708 = vrot.slane %v701, %v707
      %v710 = vunpack.c.l.s4 1966171168
      %v711 = vunpack.c.0.s8 %v710
      %v712 = vlaneseq
      %v713 = vshrl.u32 %v712, 7
      %v714 = vsub.s32 %v711, %v713
      %v715 = vrot.slane %v708, %v714
      %v717 = vadd.f32 %v656, %v715
      %v718 = vlaneseq
      %vm719 = vcmp.ge.s32.totalorder %v718, 0
      %vm720 = vcmp.lt.s32.totalorder %v718, 256
      %vm721 = vmand %vm719, %vm720
      %722 = vst.msk [vmem:[%s255] sm:$0x3] %vm721, %v717
      %v723 = vld [vmem:[%s259] sm:$0x3]
      %v724 = vmul.f32 %v466, %v466
      %v725 = vmul.f32 %v468, %v468
      %v726 = vmul.f32 %v470, %v470
      %v727 = vmul.f32 %v472, %v472
      %v728 = vmul.f32 %v476, %v476
      %v729 = vmul.f32 %v478, %v478
      %v730 = vmul.f32 %v480, %v480
      %v731 = vmul.f32 %v482, %v482
      %v732 = vmul.f32 %v486, %v486
      %v733 = vmul.f32 %v488, %v488
      %v734 = vmul.f32 %v490, %v490
      %v735 = vmul.f32 %v492, %v492
      %v736 = vmul.f32 %v496, %v496
      %v737 = vmul.f32 %v498, %v498
      %v738 = vmul.f32 %v500, %v500
      %v739 = vmul.f32 %v502, %v502
      %v740 = vmul.f32 %v506, %v506
      %v741 = vmul.f32 %v508, %v508
      %v742 = vmul.f32 %v510, %v510
      %v743 = vmul.f32 %v512, %v512
      %v744 = vmul.f32 %v516, %v516
      %v745 = vmul.f32 %v518, %v518
      %v746 = vmul.f32 %v520, %v520
      %v747 = vmul.f32 %v522, %v522
      %v748 = vmul.f32 %v526, %v526
      %v749 = vmul.f32 %v528, %v528
      %v750 = vmul.f32 %v530, %v530
      %v751 = vmul.f32 %v532, %v532
      %v752 = vmul.f32 %v536, %v536
      %v753 = vmul.f32 %v538, %v538
      %v754 = vmul.f32 %v540, %v540
      %v755 = vmul.f32 %v542, %v542
      %v756 = vadd.f32 %v724, %v726
      %v757 = vadd.f32 %v756, %v728
      %v758 = vadd.f32 %v757, %v730
      %v759 = vadd.f32 %v758, %v732
      %v760 = vadd.f32 %v759, %v734
      %v761 = vadd.f32 %v760, %v736
      %v762 = vadd.f32 %v761, %v738
      %v763 = vadd.f32 %v762, %v740
      %v764 = vadd.f32 %v763, %v742
      %v765 = vadd.f32 %v764, %v744
      %v766 = vadd.f32 %v765, %v746
      %v767 = vadd.f32 %v766, %v748
      %v768 = vadd.f32 %v767, %v750
      %v769 = vadd.f32 %v768, %v752
      %v770 = vadd.f32 %v769, %v754
      %v771 = vrot.slane %v770, 4
      %v772 = vadd.f32 %v770, %v771
      %v773 = vrot.slane %v772, 2
      %v774 = vadd.f32 %v772, %v773
      %v775 = vrot.slane %v774, 1
      %v776 = vadd.f32 %v774, %v775
      %v777 = vadd.f32 %v725, %v727
      %v778 = vadd.f32 %v777, %v729
      %v779 = vadd.f32 %v778, %v731
      %v780 = vadd.f32 %v779, %v733
      %v781 = vadd.f32 %v780, %v735
      %v782 = vadd.f32 %v781, %v737
      %v783 = vadd.f32 %v782, %v739
      %v784 = vadd.f32 %v783, %v741
      %v785 = vadd.f32 %v784, %v743
      %v786 = vadd.f32 %v785, %v745
      %v787 = vadd.f32 %v786, %v747
      %v788 = vadd.f32 %v787, %v749
      %v789 = vadd.f32 %v788, %v751
      %v790 = vadd.f32 %v789, %v753
      %v791 = vadd.f32 %v790, %v755
      %v792 = vrot.slane %v791, 4
      %v793 = vadd.f32 %v791, %v792
      %v794 = vrot.slane %v793, 2
      %v795 = vadd.f32 %v793, %v794
      %v796 = vrot.slane %v795, 1
      %v797 = vadd.f32 %v795, %v796
      %v800 = vcombine.low %v776, %v797
      %v802 = vunpack.c.l.s4 1966171168
      %v803 = vunpack.c.0.s8 %v802
      %v804 = vlaneseq
      %v805 = vshrl.u32 %v804, 7
      %v806 = vsub.s32 %v803, %v805
      %v807 = vrot.slane %v800, %v806
      %v809 = vunpack.c.l.s4 1966171168
      %v810 = vunpack.c.0.s8 %v809
      %v811 = vlaneseq
      %v812 = vshrl.u32 %v811, 7
      %v813 = vsub.s32 %v810, %v812
      %v814 = vrot.slane %v807, %v813
      %v816 = vadd.f32 %v723, %v814
      %817 = vst.msk [vmem:[%s259] sm:$0x3] %vm721, %v816
      %s818 = smul.u32 %s20, 4
      %s819 = sadd.s32 %s818, %s21
      %s820 = smul.u32 16, %s819
      %p821 = scmp.lt.s32.totalorder %s820, 63
      %s822 = scalar_select %p821, %s820, 63
      %s823 = smul.addr %s822, 2
      %s824 = smul.addr %s823, 4
      %s825 = scalar_lea.vmem %s2, %s824
      %p826 = scmp.lt.s32.totalorder %s20, 0
      %s827 = scalar_select %p826, %s20, 0
      %s828 = smul.addr %s827, 2
      %s829 = scalar_lea.vmem %s3, %s828
      %p830 = scmp.lt.s32.totalorder %s20, 0
      %s831 = scalar_select %p830, %s20, 0
      %s832 = smul.addr %s831, 2
      %s833 = scalar_lea.vmem %s4, %s832
      // Predicated region
      $region33: #{projection_head.3} parent=27 // pred_check
        %p834 = pneg %p101
      $region34: #{projection_head.3} parent=27 // pred_check_branch
        %836 = sbr.rel (%p834) target = $region36
      $region35: #{projection_head.3} parent=27 // pred_region
        %s837 = smul.u32 %s20, 4
        %s838 = sadd.s32 %s837, %s21
        %s839 = smul.u32 16, %s838
      $region36: #{projection_head.3} parent=27 // pred_fallthru
        _
      // Predicated region
      $region37: #{projection_head.3} parent=27 // pred_check
        %p840 = pneg %p127
      $region38: #{projection_head.3} parent=27 // pred_check_branch
        %842 = sbr.rel (%p840) target = $region40
      $region39: #{projection_head.3} parent=27 // pred_region
        _
      $region40: #{projection_head.3} parent=27 // pred_fallthru
        _
      // Predicated region
      $region41: #{projection_head.3} parent=27 // pred_check
        %p843 = pneg %p153
      $region42: #{projection_head.3} parent=27 // pred_check_branch
        %845 = sbr.rel (%p843) target = $region44
      $region43: #{projection_head.3} parent=27 // pred_region
        _
      $region44: #{projection_head.3} parent=27 // pred_fallthru
        _
      // Predicated region
      $region45: #{projection_head.3} parent=27 // pred_check
        %p846 = pneg %p127
      $region46: #{projection_head.3} parent=27 // pred_check_branch
        %848 = sbr.rel (%p846) target = $region48
      $region47: #{projection_head.3} parent=27 // pred_region
        %p849 = scmp.lt.s32.totalorder %s20, 0
        %s850 = scalar_select %p849, %s20, 0
        %s851 = smul.addr %s850, 2
        %s852 = scalar_lea.vmem %s3, %s851
      $region48: #{projection_head.3} parent=27 // pred_fallthru
        _
      // Predicated region
      $region49: #{projection_head.3} parent=27 // pred_check
        %p853 = pneg %p153
      $region50: #{projection_head.3} parent=27 // pred_check_branch
        %855 = sbr.rel (%p853) target = $region52
      $region51: #{projection_head.3} parent=27 // pred_region
        %p856 = scmp.lt.s32.totalorder %s20, 0
        %s857 = scalar_select %p856, %s20, 0
        %s858 = smul.addr %s857, 2
        %s859 = scalar_lea.vmem %s4, %s858
      $region52: #{projection_head.3} parent=27 // pred_fallthru
        _
    $region28: #{projection_head.3} parent=5 // pred_fallthru
      _
    %p860 = scmp.le.s32.totalorder 2, %s11
    // Predicated region
    $region53: #{projection_head.3} parent=5 // pred_check
      %p861 = pneg %p860
    $region54: #{projection_head.3} parent=5 // pred_check_branch
      %863 = sbr.rel (%p861) target = $region56
    $region55: #{projection_head.3} parent=5 // pred_region
      %s864 = ssub.s32 %s11, 2
      // Predicated region
      $region57: #{projection_head.3} parent=55 // pred_check
        %p865 = pneg %p107
      $region58: #{projection_head.3} parent=55 // pred_check_branch
        %867 = sbr.rel (%p865) target = $region60
      $region59: #{projection_head.3} parent=55 // pred_region
        %s868 = smul.u32 %s22, 4
        %s869 = sadd.s32 %s868, %s23
        %s870 = smul.u32 16, %s869
        %p871 = scmp.lt.s32.totalorder %s870, 63
        %s872 = scalar_select %p871, %s870, 63
        %s873 = smul.addr %s872, 2
        %s874 = smul.addr %s873, 4
        %s875 = scalar_lea.vmem %s2, %s874
      $region60: #{projection_head.3} parent=55 // pred_fallthru
        _
    $region56: #{projection_head.3} parent=5 // pred_fallthru
      _
  $region6: #{projection_head.3} parent=0 // loop_footer
    %s15 = sadd.s32 1, %s11
  $region7: #{projection_head.3} parent=0 // loop_footer_branch
    %10 = sbr.rel target = $region3
  $region8: #{projection_head.3} parent=0 // loop_exit
    _

</llo_original>
